<compile_context>
chip_gen: v7x
topology: tpu7x:2x2x1
jax: 0.10.0
libtpu: 0.0.40
codegen_flags: <defaults>
</compile_context>

<pallas_src>
import math
from functools import partial

import jax
import jax.numpy as jnp
from jax.experimental import pallas as pl
from jax.experimental.pallas import tpu as pltpu


# ---------------------------------------------------------------------------
# Tiling helpers
# ---------------------------------------------------------------------------
def _pick_tile(dim, target, align):
    """Largest `align`-aligned divisor of `dim` that is <= target.

    Falls back to the full dim (which always satisfies the TPU (8,128)/full-dim
    block rule) if no aligned divisor exists below the target."""
    if dim <= target:
        return dim
    start = target - (target % align)
    for t in range(start, 0, -align):
        if dim % t == 0:
            return t
    return dim


def _compiler_params(dim_sems, live_block_bytes, scratch_bytes=0):
    """dimension_semantics + a vmem limit ~ 2x(double-buffered blocks)+scratch+headroom."""
    need = 2 * int(live_block_bytes) + int(scratch_bytes) + (4 << 20)
    limit = int(max(32 << 20, min(need, 100 << 20)))
    return pltpu.CompilerParams(dimension_semantics=dim_sems,
                                vmem_limit_bytes=limit)


# ---------------------------------------------------------------------------
# Tiled linear kernels (bias-free and biased variants)
# ---------------------------------------------------------------------------
def _linear_kernel(x_ref, w_ref, o_ref, acc_ref):
    @pl.when(pl.program_id(2) == 0)
    def _():
        acc_ref[...] = jnp.zeros_like(acc_ref)

    acc_ref[...] += jnp.dot(x_ref[...], w_ref[...],
                            preferred_element_type=jnp.float32)

    @pl.when(pl.program_id(2) == pl.num_programs(2) - 1)
    def _():
        o_ref[...] = acc_ref[...].astype(o_ref.dtype)


def _linear_bias_kernel(x_ref, w_ref, b_ref, o_ref, acc_ref):
    @pl.when(pl.program_id(2) == 0)
    def _():
        acc_ref[...] = jnp.zeros_like(acc_ref)

    acc_ref[...] += jnp.dot(x_ref[...], w_ref[...],
                            preferred_element_type=jnp.float32)

    @pl.when(pl.program_id(2) == pl.num_programs(2) - 1)
    def _():
        o_ref[...] = (acc_ref[...] + b_ref[...].astype(jnp.float32)
                      ).astype(o_ref.dtype)


def linear2d(x, w, b=None, *, out_dtype=None, compute_dtype=None,
             tm_target=256, tn_target=512, tk_target=512):
    """y = x @ w (+ b).  x: (R, Din), w: (Din, Dout), b: (Dout,) or None."""
    R, Din = x.shape
    Dout = w.shape[1]
    out_dtype = out_dtype if out_dtype is not None else x.dtype
    if compute_dtype is not None:
        x = x.astype(compute_dtype)
        w = w.astype(compute_dtype)

    ebytes = jnp.dtype(x.dtype).itemsize
    row_align = 16 if ebytes == 2 else 8
    tm = _pick_tile(R, tm_target, row_align)
    tn = _pick_tile(Dout, tn_target, 128)
    tk = _pick_tile(Din, tk_target, 128)
    grid = (R // tm, Dout // tn, Din // tk)

    in_specs = [
        pl.BlockSpec((tm, tk), lambda i, j, k: (i, k)),
        pl.BlockSpec((tk, tn), lambda i, j, k: (k, j)),
    ]
    args = (x, w)
    kernel = _linear_kernel
    bias_bytes = 0
    if b is not None:
        in_specs.append(pl.BlockSpec((1, tn), lambda i, j, k: (0, j)))
        args = (x, w, b.reshape(1, Dout))
        kernel = _linear_bias_kernel
        bias_bytes = tn * jnp.dtype(b.dtype).itemsize

    block_bytes = ((tm * tk + tk * tn) * ebytes
                   + tm * tn * jnp.dtype(out_dtype).itemsize + bias_bytes)
    acc_bytes = tm * tn * 4

    return pl.pallas_call(
        kernel,
        out_shape=jax.ShapeDtypeStruct((R, Dout), out_dtype),
        grid=grid,
        in_specs=in_specs,
        out_specs=pl.BlockSpec((tm, tn), lambda i, j, k: (i, j)),
        scratch_shapes=[pltpu.VMEM((tm, tn), jnp.float32)],
        compiler_params=_compiler_params(("parallel", "parallel", "arbitrary"),
                                         block_bytes, acc_bytes),
    )(*args)


def linear3d(x, w, b=None, **kw):
    B, L, D = x.shape
    return linear2d(x.reshape(B * L, D), w, b, **kw).reshape(B, L, -1)


# ---------------------------------------------------------------------------
# Flash-style multi-head cross attention (online softmax, all heads per step)
# ---------------------------------------------------------------------------
def _flash_mha_kernel(q_ref, k_ref, v_ref, o_ref, m_ref, l_ref, acc_ref, *,
                      scale, heads):
    kv_i = pl.program_id(2)

    @pl.when(kv_i == 0)
    def _():
        m_ref[...] = jnp.full_like(m_ref, -jnp.inf)
        l_ref[...] = jnp.zeros_like(l_ref)
        acc_ref[...] = jnp.zeros_like(acc_ref)

    q = q_ref[0]          # (tq,  H*C)   lane-dense block
    k = k_ref[0]          # (tkv, H*C)
    v = v_ref[0]          # (tkv, H*C)
    c = q.shape[-1] // heads

    # All heads of this (batch, q-tile) are handled in one grid step; the per-head
    # split is a static lane slice in VMEM (no HBM head transpose anywhere).
    for h in range(heads):
        sl = slice(h * c, (h + 1) * c)
        s = jax.lax.dot_general(q[:, sl], k[:, sl], (((1,), (1,)), ((), ())),
                                preferred_element_type=jnp.float32) * scale
        m_prev = m_ref[:, h:h + 1]
        m_new = jnp.maximum(m_prev, jnp.max(s, axis=-1, keepdims=True))
        alpha = jnp.exp(m_prev - m_new)
        p = jnp.exp(s - m_new)
        l_ref[:, h:h + 1] = alpha * l_ref[:, h:h + 1] + jnp.sum(
            p, axis=-1, keepdims=True)
        acc_ref[:, sl] = alpha * acc_ref[:, sl] + jnp.dot(
            p.astype(v.dtype), v[:, sl], preferred_element_type=jnp.float32)
        m_ref[:, h:h + 1] = m_new

    @pl.when(kv_i == pl.num_programs(2) - 1)
    def _():
        parts = []
        for h in range(heads):
            sl = slice(h * c, (h + 1) * c)
            inv_l = pl.reciprocal(l_ref[:, h:h + 1], approx=True)
            parts.append(acc_ref[:, sl] * inv_l)
        # single lane-dense store of the whole (tq, H*C) output tile
        o_ref[0] = jnp.concatenate(parts, axis=-1).astype(o_ref.dtype)


def mha(q, k, v, heads, *, tq_target=256, tkv_target=512):
    """q: (B, N, H*C), k/v: (B, M, H*C) -> (B, N, H*C).
    Exact softmax attention, scale = C**-0.5 (xformers memory_efficient_attention)."""
    B, N, HC = q.shape
    M = k.shape[1]
    C = HC // heads
    scale = 1.0 / math.sqrt(C)

    ebytes = jnp.dtype(q.dtype).itemsize
    row_align = 16 if ebytes == 2 else 8
    tq = _pick_tile(N, tq_target, row_align)
    tkv = _pick_tile(M, tkv_target, row_align)
    grid = (B, N // tq, M // tkv)

    block_bytes = (tq * HC + 2 * tkv * HC + tq * HC) * ebytes
    scratch_bytes = (2 * tq * heads + tq * HC) * 4

    return pl.pallas_call(
        partial(_flash_mha_kernel, scale=scale, heads=heads),
        out_shape=jax.ShapeDtypeStruct((B, N, HC), q.dtype),
        grid=grid,
        in_specs=[
            pl.BlockSpec((1, tq, HC), lambda b, qi, ki: (b, qi, 0)),
            pl.BlockSpec((1, tkv, HC), lambda b, qi, ki: (b, ki, 0)),
            pl.BlockSpec((1, tkv, HC), lambda b, qi, ki: (b, ki, 0)),
        ],
        out_specs=pl.BlockSpec((1, tq, HC), lambda b, qi, ki: (b, qi, 0)),
        scratch_shapes=[
            pltpu.VMEM((tq, heads), jnp.float32),   # running max m
            pltpu.VMEM((tq, heads), jnp.float32),   # running denom l
            pltpu.VMEM((tq, HC), jnp.float32),      # running numerator acc
        ],
        compiler_params=_compiler_params(("parallel", "parallel", "arbitrary"),
                                         block_bytes, scratch_bytes),
    )(q, k, v)


# ---------------------------------------------------------------------------
# ModulatedCrossAttention.forward
# ---------------------------------------------------------------------------
def modulated_cross_attention(params, x, key, value, heads, mask=None,
                              compute_dtype=jnp.bfloat16):
    """Conditional branch of ModulatedCrossAttention (is_conditional_branch=True at
    module init => plain cross attention; Dropout(p=0) is a no-op)."""
    if mask is not None:
        # TODO(synk): attn_bias / mask path of xformers.memory_efficient_attention not ported.
        raise NotImplementedError("mask / attn_bias is not supported")

    # Bias-free q/k/v projections; outputs kept in the (bf16) compute dtype so the
    # attention kernel streams half the HBM bytes.  Accumulation is always f32.
    q = linear3d(x, params["wq"], compute_dtype=compute_dtype, out_dtype=compute_dtype)
    k = linear3d(key, params["wk"], compute_dtype=compute_dtype, out_dtype=compute_dtype)
    v = linear3d(value, params["wv"], compute_dtype=compute_dtype, out_dtype=compute_dtype)

    out = mha(q, k, v, heads)                                   # (B, N, H*C)

    # to_out: Linear(inner -> query_dim) with bias, back to the input dtype.
    return linear3d(out, params["wo"], params["bo"],
                    compute_dtype=compute_dtype, out_dtype=x.dtype)


# ---------------------------------------------------------------------------
# Deterministic parameter init (weights stored (in, out), matching nn.Linear.T)
# ---------------------------------------------------------------------------
def init_params(key, query_dim, key_dim, value_dim, heads, dim_head):
    inner = heads * dim_head
    k1, k2, k3, k4, k5 = jax.random.split(key, 5)

    def w(k, shape):
        return jax.random.normal(k, shape, jnp.float32) * 0.02

    return dict(
        wq=w(k1, (query_dim, inner)),
        wk=w(k2, (key_dim, inner)),
        wv=w(k3, (value_dim, inner)),
        wo=w(k4, (inner, query_dim)),
        bo=w(k5, (query_dim,)),
    )


# ---------------------------------------------------------------------------
def _reference(params, x, key, value, heads):
    """Plain-JAX f32 reference of the module forward (for a sanity check)."""
    q = x @ params["wq"]
    k = key @ params["wk"]
    v = value @ params["wv"]
    B, N, HC = q.shape
    C = HC // heads

    def split(t):
        b, l, _ = t.shape
        return t.reshape(b, l, heads, C).transpose(0, 2, 1, 3)

    qh, kh, vh = split(q), split(k), split(v)
    s = jnp.einsum("bhnc,bhmc->bhnm", qh, kh) / math.sqrt(C)
    p = jax.nn.softmax(s, axis=-1)
    o = jnp.einsum("bhnm,bhmc->bhnc", p, vh)
    o = o.transpose(0, 2, 1, 3).reshape(B, N, HC)
    return o @ params["wo"] + params["bo"]


if __name__ == "__main__":
    # Small shapes consistent with the module:
    #   batch B=2, N=16 query tokens, M=8 key/value tokens,
    #   query_dim=key_dim=value_dim=32, heads=4, dim_head=8 (inner=32).
    B, N, M = 2, 16, 8
    query_dim = key_dim = value_dim = 32
    heads, dim_head = 4, 8

    root = jax.random.PRNGKey(0)
    kp, kx, kk, kv = jax.random.split(root, 4)

    params = init_params(kp, query_dim, key_dim, value_dim, heads, dim_head)
    x = jax.random.normal(kx, (B, N, query_dim), jnp.float32)
    key_in = jax.random.normal(kk, (B, M, key_dim), jnp.float32)
    value_in = jax.random.normal(kv, (B, M, value_dim), jnp.float32)

    fwd = jax.jit(partial(modulated_cross_attention, heads=heads))
    out = fwd(params, x, key_in, value_in)
    jax.block_until_ready(out)

    assert out.shape == (B, N, query_dim)
    assert bool(jnp.all(jnp.isfinite(out)))

    ref = _reference(params, x, key_in, value_in, heads)
    max_err = float(jnp.max(jnp.abs(out - ref)))
    assert max_err < 5e-2, f"mismatch vs reference: {max_err}"

    print("KERNEL_OK")
</pallas_src>

<mosaic_0001>
module attributes {stable_mosaic.version = 11 : i64} {
  func.func @_linear_kernel(%arg0: i32, %arg1: i32, %arg2: i32, %arg3: memref<32x32xbf16, #tpu.memory_space<vmem>>, %arg4: memref<32x32xbf16, #tpu.memory_space<vmem>>, %arg5: memref<32x32xbf16, #tpu.memory_space<vmem>>, %arg6: memref<32x32xf32, #tpu.memory_space<vmem>>) attributes {dimension_semantics = [#tpu.dimension_semantics<parallel>, #tpu.dimension_semantics<parallel>, #tpu.dimension_semantics<arbitrary>], iteration_bounds = array<i64: 1, 1, 1>, scalar_prefetch = 0 : i64, scratch_operands = 1 : i64, tpu.core_type = #tpu.core_type<tc>, window_params = [{transform_indices = @transform_0, window_bounds = array<i64: 32, 32>}, {transform_indices = @transform_1, window_bounds = array<i64: 32, 32>}, {transform_indices = @transform_2, window_bounds = array<i64: 32, 32>}]} {
    %c0_i32 = arith.constant 0 : i32
    %0 = arith.cmpi eq, %arg2, %c0_i32 : i32
    %1 = arith.extui %0 : i1 to i32
    %c0_i32_0 = arith.constant 0 : i32
    %2 = arith.cmpi ne, %1, %c0_i32_0 : i32
    scf.if %2 {
      %cst_10 = arith.constant 0.000000e+00 : f32
      %12 = vector.broadcast %cst_10 : f32 to vector<32x32xf32>
      %c0_11 = arith.constant 0 : index
      %c0_12 = arith.constant 0 : index
      %13 = vector.load %arg6[%c0_11, %c0_12] : memref<32x32xf32, #tpu.memory_space<vmem>>, vector<32x32xf32>
      tpu.vector_store %arg6[%c0_11, %c0_12], %12 {strides = array<i32>} : memref<32x32xf32, #tpu.memory_space<vmem>>, vector<32x32xf32>,
    } else {
    }
    %c0 = arith.constant 0 : index
    %c0_1 = arith.constant 0 : index
    %3 = vector.load %arg6[%c0, %c0_1] : memref<32x32xf32, #tpu.memory_space<vmem>>, vector<32x32xf32>
    %c0_2 = arith.constant 0 : index
    %c0_3 = arith.constant 0 : index
    %4 = vector.load %arg3[%c0_2, %c0_3] : memref<32x32xbf16, #tpu.memory_space<vmem>>, vector<32x32xbf16>
    %c0_4 = arith.constant 0 : index
    %c0_5 = arith.constant 0 : index
    %5 = vector.load %arg4[%c0_4, %c0_5] : memref<32x32xbf16, #tpu.memory_space<vmem>>, vector<32x32xbf16>
    %cst = arith.constant dense<0.000000e+00> : vector<32x32xf32>
    %6 = tpu.matmul %4, %5, %cst {dimension_numbers = #tpu.dot_dimension_numbers<[1], [0], [0], [1], [0, 0, 1, 1], [], []>} : vector<32x32xbf16>, vector<32x32xbf16>, vector<32x32xf32> -> vector<32x32xf32>
    %7 = arith.addf %3, %6 : vector<32x32xf32>
    %c0_6 = arith.constant 0 : index
    %c0_7 = arith.constant 0 : index
    %8 = vector.load %arg6[%c0_6, %c0_7] : memref<32x32xf32, #tpu.memory_space<vmem>>, vector<32x32xf32>
    tpu.vector_store %arg6[%c0_6, %c0_7], %7 {strides = array<i32>} : memref<32x32xf32, #tpu.memory_space<vmem>>, vector<32x32xf32>,
    %c0_i32_8 = arith.constant 0 : i32
    %9 = arith.cmpi eq, %arg2, %c0_i32_8 : i32
    %10 = arith.extui %9 : i1 to i32
    %c0_i32_9 = arith.constant 0 : i32
    %11 = arith.cmpi ne, %10, %c0_i32_9 : i32
    scf.if %11 {
      %c0_10 = arith.constant 0 : index
      %c0_11 = arith.constant 0 : index
      %12 = vector.load %arg6[%c0_10, %c0_11] : memref<32x32xf32, #tpu.memory_space<vmem>>, vector<32x32xf32>
      %13 = arith.truncf %12 : vector<32x32xf32> to vector<32x32xbf16>
      %c0_12 = arith.constant 0 : index
      %c0_13 = arith.constant 0 : index
      %14 = vector.load %arg5[%c0_12, %c0_13] : memref<32x32xbf16, #tpu.memory_space<vmem>>, vector<32x32xbf16>
      tpu.vector_store %arg5[%c0_12, %c0_13], %13 {strides = array<i32>} : memref<32x32xbf16, #tpu.memory_space<vmem>>, vector<32x32xbf16>,
    } else {
    }
    return
  }
  func.func @transform_0(%arg0: i32, %arg1: i32, %arg2: i32) -> (i32, i32) {
    %c0_i32 = arith.constant 0 : i32
    return %arg0, %arg2 : i32, i32
  }
  func.func @transform_1(%arg0: i32, %arg1: i32, %arg2: i32) -> (i32, i32) {
    %c0_i32 = arith.constant 0 : i32
    return %arg2, %arg1 : i32, i32
  }
  func.func @transform_2(%arg0: i32, %arg1: i32, %arg2: i32) -> (i32, i32) {
    %c0_i32 = arith.constant 0 : i32
    return %arg0, %arg1 : i32, i32
  }
}

module attributes {stable_mosaic.version = 11 : i64} {
  func.func @_linear_bias_kernel(%arg0: i32, %arg1: i32, %arg2: i32, %arg3: memref<32x32xbf16, #tpu.memory_space<vmem>>, %arg4: memref<32x32xbf16, #tpu.memory_space<vmem>>, %arg5: memref<1x32xf32, #tpu.memory_space<vmem>>, %arg6: memref<32x32xf32, #tpu.memory_space<vmem>>, %arg7: memref<32x32xf32, #tpu.memory_space<vmem>>) attributes {dimension_semantics = [#tpu.dimension_semantics<parallel>, #tpu.dimension_semantics<parallel>, #tpu.dimension_semantics<arbitrary>], iteration_bounds = array<i64: 1, 1, 1>, scalar_prefetch = 0 : i64, scratch_operands = 1 : i64, tpu.core_type = #tpu.core_type<tc>, window_params = [{transform_indices = @transform_0, window_bounds = array<i64: 32, 32>}, {transform_indices = @transform_1, window_bounds = array<i64: 32, 32>}, {transform_indices = @transform_2, window_bounds = array<i64: 1, 32>}, {transform_indices = @transform_3, window_bounds = array<i64: 32, 32>}]} {
    %c0_i32 = arith.constant 0 : i32
    %0 = arith.cmpi eq, %arg2, %c0_i32 : i32
    %1 = arith.extui %0 : i1 to i32
    %c0_i32_0 = arith.constant 0 : i32
    %2 = arith.cmpi ne, %1, %c0_i32_0 : i32
    scf.if %2 {
      %cst_10 = arith.constant 0.000000e+00 : f32
      %12 = vector.broadcast %cst_10 : f32 to vector<32x32xf32>
      %c0_11 = arith.constant 0 : index
      %c0_12 = arith.constant 0 : index
      %13 = vector.load %arg7[%c0_11, %c0_12] : memref<32x32xf32, #tpu.memory_space<vmem>>, vector<32x32xf32>
      tpu.vector_store %arg7[%c0_11, %c0_12], %12 {strides = array<i32>} : memref<32x32xf32, #tpu.memory_space<vmem>>, vector<32x32xf32>,
    } else {
    }
    %c0 = arith.constant 0 : index
    %c0_1 = arith.constant 0 : index
    %3 = vector.load %arg7[%c0, %c0_1] : memref<32x32xf32, #tpu.memory_space<vmem>>, vector<32x32xf32>
    %c0_2 = arith.constant 0 : index
    %c0_3 = arith.constant 0 : index
    %4 = vector.load %arg3[%c0_2, %c0_3] : memref<32x32xbf16, #tpu.memory_space<vmem>>, vector<32x32xbf16>
    %c0_4 = arith.constant 0 : index
    %c0_5 = arith.constant 0 : index
    %5 = vector.load %arg4[%c0_4, %c0_5] : memref<32x32xbf16, #tpu.memory_space<vmem>>, vector<32x32xbf16>
    %cst = arith.constant dense<0.000000e+00> : vector<32x32xf32>
    %6 = tpu.matmul %4, %5, %cst {dimension_numbers = #tpu.dot_dimension_numbers<[1], [0], [0], [1], [0, 0, 1, 1], [], []>} : vector<32x32xbf16>, vector<32x32xbf16>, vector<32x32xf32> -> vector<32x32xf32>
    %7 = arith.addf %3, %6 : vector<32x32xf32>
    %c0_6 = arith.constant 0 : index
    %c0_7 = arith.constant 0 : index
    %8 = vector.load %arg7[%c0_6, %c0_7] : memref<32x32xf32, #tpu.memory_space<vmem>>, vector<32x32xf32>
    tpu.vector_store %arg7[%c0_6, %c0_7], %7 {strides = array<i32>} : memref<32x32xf32, #tpu.memory_space<vmem>>, vector<32x32xf32>,
    %c0_i32_8 = arith.constant 0 : i32
    %9 = arith.cmpi eq, %arg2, %c0_i32_8 : i32
    %10 = arith.extui %9 : i1 to i32
    %c0_i32_9 = arith.constant 0 : i32
    %11 = arith.cmpi ne, %10, %c0_i32_9 : i32
    scf.if %11 {
      %c0_10 = arith.constant 0 : index
      %c0_11 = arith.constant 0 : index
      %12 = vector.load %arg7[%c0_10, %c0_11] : memref<32x32xf32, #tpu.memory_space<vmem>>, vector<32x32xf32>
      %c0_12 = arith.constant 0 : index
      %c0_13 = arith.constant 0 : index
      %13 = vector.load %arg5[%c0_12, %c0_13] : memref<1x32xf32, #tpu.memory_space<vmem>>, vector<1x32xf32>
      %14 = vector.broadcast %13 : vector<1x32xf32> to vector<32x32xf32>
      %15 = arith.addf %12, %14 : vector<32x32xf32>
      %c0_14 = arith.constant 0 : index
      %c0_15 = arith.constant 0 : index
      %16 = vector.load %arg6[%c0_14, %c0_15] : memref<32x32xf32, #tpu.memory_space<vmem>>, vector<32x32xf32>
      tpu.vector_store %arg6[%c0_14, %c0_15], %15 {strides = array<i32>} : memref<32x32xf32, #tpu.memory_space<vmem>>, vector<32x32xf32>,
    } else {
    }
    return
  }
  func.func @transform_0(%arg0: i32, %arg1: i32, %arg2: i32) -> (i32, i32) {
    %c0_i32 = arith.constant 0 : i32
    return %arg0, %arg2 : i32, i32
  }
  func.func @transform_1(%arg0: i32, %arg1: i32, %arg2: i32) -> (i32, i32) {
    %c0_i32 = arith.constant 0 : i32
    return %arg2, %arg1 : i32, i32
  }
  func.func @transform_2(%arg0: i32, %arg1: i32, %arg2: i32) -> (i32, i32) {
    %c0_i32 = arith.constant 0 : i32
    %c0_i32_0 = arith.constant 0 : i32
    return %c0_i32, %arg1 : i32, i32
  }
  func.func @transform_3(%arg0: i32, %arg1: i32, %arg2: i32) -> (i32, i32) {
    %c0_i32 = arith.constant 0 : i32
    return %arg0, %arg1 : i32, i32
  }
}

module attributes {stable_mosaic.version = 11 : i64} {
  func.func @_linear_kernel(%arg0: i32, %arg1: i32, %arg2: i32, %arg3: memref<16x32xbf16, #tpu.memory_space<vmem>>, %arg4: memref<32x32xbf16, #tpu.memory_space<vmem>>, %arg5: memref<16x32xbf16, #tpu.memory_space<vmem>>, %arg6: memref<16x32xf32, #tpu.memory_space<vmem>>) attributes {dimension_semantics = [#tpu.dimension_semantics<parallel>, #tpu.dimension_semantics<parallel>, #tpu.dimension_semantics<arbitrary>], iteration_bounds = array<i64: 1, 1, 1>, scalar_prefetch = 0 : i64, scratch_operands = 1 : i64, tpu.core_type = #tpu.core_type<tc>, window_params = [{transform_indices = @transform_0, window_bounds = array<i64: 16, 32>}, {transform_indices = @transform_1, window_bounds = array<i64: 32, 32>}, {transform_indices = @transform_2, window_bounds = array<i64: 16, 32>}]} {
    %c0_i32 = arith.constant 0 : i32
    %0 = arith.cmpi eq, %arg2, %c0_i32 : i32
    %1 = arith.extui %0 : i1 to i32
    %c0_i32_0 = arith.constant 0 : i32
    %2 = arith.cmpi ne, %1, %c0_i32_0 : i32
    scf.if %2 {
      %cst_10 = arith.constant 0.000000e+00 : f32
      %12 = vector.broadcast %cst_10 : f32 to vector<16x32xf32>
      %c0_11 = arith.constant 0 : index
      %c0_12 = arith.constant 0 : index
      %13 = vector.load %arg6[%c0_11, %c0_12] : memref<16x32xf32, #tpu.memory_space<vmem>>, vector<16x32xf32>
      tpu.vector_store %arg6[%c0_11, %c0_12], %12 {strides = array<i32>} : memref<16x32xf32, #tpu.memory_space<vmem>>, vector<16x32xf32>,
    } else {
    }
    %c0 = arith.constant 0 : index
    %c0_1 = arith.constant 0 : index
    %3 = vector.load %arg6[%c0, %c0_1] : memref<16x32xf32, #tpu.memory_space<vmem>>, vector<16x32xf32>
    %c0_2 = arith.constant 0 : index
    %c0_3 = arith.constant 0 : index
    %4 = vector.load %arg3[%c0_2, %c0_3] : memref<16x32xbf16, #tpu.memory_space<vmem>>, vector<16x32xbf16>
    %c0_4 = arith.constant 0 : index
    %c0_5 = arith.constant 0 : index
    %5 = vector.load %arg4[%c0_4, %c0_5] : memref<32x32xbf16, #tpu.memory_space<vmem>>, vector<32x32xbf16>
    %cst = arith.constant dense<0.000000e+00> : vector<16x32xf32>
    %6 = tpu.matmul %4, %5, %cst {dimension_numbers = #tpu.dot_dimension_numbers<[1], [0], [0], [1], [0, 0, 1, 1], [], []>} : vector<16x32xbf16>, vector<32x32xbf16>, vector<16x32xf32> -> vector<16x32xf32>
    %7 = arith.addf %3, %6 : vector<16x32xf32>
    %c0_6 = arith.constant 0 : index
    %c0_7 = arith.constant 0 : index
    %8 = vector.load %arg6[%c0_6, %c0_7] : memref<16x32xf32, #tpu.memory_space<vmem>>, vector<16x32xf32>
    tpu.vector_store %arg6[%c0_6, %c0_7], %7 {strides = array<i32>} : memref<16x32xf32, #tpu.memory_space<vmem>>, vector<16x32xf32>,
    %c0_i32_8 = arith.constant 0 : i32
    %9 = arith.cmpi eq, %arg2, %c0_i32_8 : i32
    %10 = arith.extui %9 : i1 to i32
    %c0_i32_9 = arith.constant 0 : i32
    %11 = arith.cmpi ne, %10, %c0_i32_9 : i32
    scf.if %11 {
      %c0_10 = arith.constant 0 : index
      %c0_11 = arith.constant 0 : index
      %12 = vector.load %arg6[%c0_10, %c0_11] : memref<16x32xf32, #tpu.memory_space<vmem>>, vector<16x32xf32>
      %13 = arith.truncf %12 : vector<16x32xf32> to vector<16x32xbf16>
      %c0_12 = arith.constant 0 : index
      %c0_13 = arith.constant 0 : index
      %14 = vector.load %arg5[%c0_12, %c0_13] : memref<16x32xbf16, #tpu.memory_space<vmem>>, vector<16x32xbf16>
      tpu.vector_store %arg5[%c0_12, %c0_13], %13 {strides = array<i32>} : memref<16x32xbf16, #tpu.memory_space<vmem>>, vector<16x32xbf16>,
    } else {
    }
    return
  }
  func.func @transform_0(%arg0: i32, %arg1: i32, %arg2: i32) -> (i32, i32) {
    %c0_i32 = arith.constant 0 : i32
    return %arg0, %arg2 : i32, i32
  }
  func.func @transform_1(%arg0: i32, %arg1: i32, %arg2: i32) -> (i32, i32) {
    %c0_i32 = arith.constant 0 : i32
    return %arg2, %arg1 : i32, i32
  }
  func.func @transform_2(%arg0: i32, %arg1: i32, %arg2: i32) -> (i32, i32) {
    %c0_i32 = arith.constant 0 : i32
    return %arg0, %arg1 : i32, i32
  }
}

module attributes {stable_mosaic.version = 11 : i64} {
  func.func @_flash_mha_kernel(%arg0: i32, %arg1: i32, %arg2: i32, %arg3: memref<1x16x32xbf16, #tpu.memory_space<vmem>>, %arg4: memref<1x8x32xbf16, #tpu.memory_space<vmem>>, %arg5: memref<1x8x32xbf16, #tpu.memory_space<vmem>>, %arg6: memref<1x16x32xbf16, #tpu.memory_space<vmem>>, %arg7: memref<16x4xf32, #tpu.memory_space<vmem>>, %arg8: memref<16x4xf32, #tpu.memory_space<vmem>>, %arg9: memref<16x32xf32, #tpu.memory_space<vmem>>) attributes {dimension_semantics = [#tpu.dimension_semantics<parallel>, #tpu.dimension_semantics<parallel>, #tpu.dimension_semantics<arbitrary>], iteration_bounds = array<i64: 2, 1, 1>, scalar_prefetch = 0 : i64, scratch_operands = 3 : i64, tpu.core_type = #tpu.core_type<tc>, window_params = [{transform_indices = @transform_0, window_bounds = array<i64: 1, 16, 32>}, {transform_indices = @transform_1, window_bounds = array<i64: 1, 8, 32>}, {transform_indices = @transform_2, window_bounds = array<i64: 1, 8, 32>}, {transform_indices = @transform_3, window_bounds = array<i64: 1, 16, 32>}]} {
    %c0_i32 = arith.constant 0 : i32
    %0 = arith.cmpi eq, %arg2, %c0_i32 : i32
    %1 = arith.extui %0 : i1 to i32
    %c0_i32_0 = arith.constant 0 : i32
    %2 = arith.cmpi ne, %1, %c0_i32_0 : i32
    scf.if %2 {
      %cst_72 = arith.constant 0xFF800000 : f32
      %128 = vector.broadcast %cst_72 : f32 to vector<16x4xf32>
      %c0_73 = arith.constant 0 : index
      %c0_74 = arith.constant 0 : index
      %129 = vector.load %arg7[%c0_73, %c0_74] : memref<16x4xf32, #tpu.memory_space<vmem>>, vector<16x4xf32>
      tpu.vector_store %arg7[%c0_73, %c0_74], %128 {strides = array<i32>} : memref<16x4xf32, #tpu.memory_space<vmem>>, vector<16x4xf32>,
      %cst_75 = arith.constant 0.000000e+00 : f32
      %130 = vector.broadcast %cst_75 : f32 to vector<16x4xf32>
      %c0_76 = arith.constant 0 : index
      %c0_77 = arith.constant 0 : index
      %131 = vector.load %arg8[%c0_76, %c0_77] : memref<16x4xf32, #tpu.memory_space<vmem>>, vector<16x4xf32>
      tpu.vector_store %arg8[%c0_76, %c0_77], %130 {strides = array<i32>} : memref<16x4xf32, #tpu.memory_space<vmem>>, vector<16x4xf32>,
      %cst_78 = arith.constant 0.000000e+00 : f32
      %132 = vector.broadcast %cst_78 : f32 to vector<16x32xf32>
      %c0_79 = arith.constant 0 : index
      %c0_80 = arith.constant 0 : index
      %133 = vector.load %arg9[%c0_79, %c0_80] : memref<16x32xf32, #tpu.memory_space<vmem>>, vector<16x32xf32>
      tpu.vector_store %arg9[%c0_79, %c0_80], %132 {strides = array<i32>} : memref<16x32xf32, #tpu.memory_space<vmem>>, vector<16x32xf32>,
    } else {
    }
    %c0 = arith.constant 0 : index
    %c0_1 = arith.constant 0 : index
    %c0_2 = arith.constant 0 : index
    %3 = vector.load %arg3[%c0, %c0_1, %c0_2] : memref<1x16x32xbf16, #tpu.memory_space<vmem>>, vector<1x16x32xbf16>
    %4 = vector.shape_cast %3 : vector<1x16x32xbf16> to vector<16x32xbf16>
    %c0_3 = arith.constant 0 : index
    %c0_4 = arith.constant 0 : index
    %c0_5 = arith.constant 0 : index
    %5 = vector.load %arg4[%c0_3, %c0_4, %c0_5] : memref<1x8x32xbf16, #tpu.memory_space<vmem>>, vector<1x8x32xbf16>
    %6 = vector.shape_cast %5 : vector<1x8x32xbf16> to vector<8x32xbf16>
    %c0_6 = arith.constant 0 : index
    %c0_7 = arith.constant 0 : index
    %c0_8 = arith.constant 0 : index
    %7 = vector.load %arg5[%c0_6, %c0_7, %c0_8] : memref<1x8x32xbf16, #tpu.memory_space<vmem>>, vector<1x8x32xbf16>
    %8 = vector.shape_cast %7 : vector<1x8x32xbf16> to vector<8x32xbf16>
    %9 = vector.extract_strided_slice %4 {offsets = [0, 0], sizes = [16, 8], strides = [1, 1]} : vector<16x32xbf16> to vector<16x8xbf16>
    %10 = vector.extract_strided_slice %6 {offsets = [0, 0], sizes = [8, 8], strides = [1, 1]} : vector<8x32xbf16> to vector<8x8xbf16>
    %cst = arith.constant dense<0.000000e+00> : vector<16x8xf32>
    %11 = tpu.matmul %9, %10, %cst {dimension_numbers = #tpu.dot_dimension_numbers<[1], [1], [0], [0], [0, 0, 1, 0], [], []>} : vector<16x8xbf16>, vector<8x8xbf16>, vector<16x8xf32> -> vector<16x8xf32>
    %cst_9 = arith.constant 0.353553385 : f32
    %12 = vector.broadcast %cst_9 : f32 to vector<16x8xf32>
    %13 = arith.mulf %11, %12 : vector<16x8xf32>
    %c0_10 = arith.constant 0 : index
    %c0_11 = arith.constant 0 : index
    %14 = vector.load %arg7[%c0_10, %c0_11] : memref<16x4xf32, #tpu.memory_space<vmem>>, vector<16x1xf32>
    %cst_12 = arith.constant dense<0xFF800000> : vector<16xf32>
    %15 = vector.multi_reduction <maximumf>, %13, %cst_12 [1] : vector<16x8xf32> to vector<16xf32>
    %16 = vector.shape_cast %15 : vector<16xf32> to vector<16x1xf32>
    %17 = arith.maximumf %14, %16 : vector<16x1xf32>
    %18 = arith.subf %14, %17 : vector<16x1xf32>
    %19 = math.exp %18 : vector<16x1xf32>
    %20 = vector.broadcast %17 : vector<16x1xf32> to vector<16x8xf32>
    %21 = arith.subf %13, %20 : vector<16x8xf32>
    %22 = math.exp %21 : vector<16x8xf32>
    %c0_13 = arith.constant 0 : index
    %c0_14 = arith.constant 0 : index
    %23 = vector.load %arg8[%c0_13, %c0_14] : memref<16x4xf32, #tpu.memory_space<vmem>>, vector<16x1xf32>
    %24 = arith.mulf %19, %23 : vector<16x1xf32>
    %cst_15 = arith.constant dense<0.000000e+00> : vector<16xf32>
    %25 = vector.multi_reduction <add>, %22, %cst_15 [1] : vector<16x8xf32> to vector<16xf32>
    %26 = vector.shape_cast %25 : vector<16xf32> to vector<16x1xf32>
    %27 = arith.addf %24, %26 : vector<16x1xf32>
    %c0_16 = arith.constant 0 : index
    %c0_17 = arith.constant 0 : index
    %28 = vector.load %arg8[%c0_16, %c0_17] : memref<16x4xf32, #tpu.memory_space<vmem>>, vector<16x1xf32>
    tpu.vector_store %arg8[%c0_16, %c0_17], %27 {strides = array<i32>} : memref<16x4xf32, #tpu.memory_space<vmem>>, vector<16x1xf32>,
    %c0_18 = arith.constant 0 : index
    %c0_19 = arith.constant 0 : index
    %29 = vector.load %arg9[%c0_18, %c0_19] : memref<16x32xf32, #tpu.memory_space<vmem>>, vector<16x8xf32>
    %30 = vector.broadcast %19 : vector<16x1xf32> to vector<16x8xf32>
    %31 = arith.mulf %30, %29 : vector<16x8xf32>
    %32 = arith.truncf %22 : vector<16x8xf32> to vector<16x8xbf16>
    %33 = vector.extract_strided_slice %8 {offsets = [0, 0], sizes = [8, 8], strides = [1, 1]} : vector<8x32xbf16> to vector<8x8xbf16>
    %cst_20 = arith.constant dense<0.000000e+00> : vector<16x8xf32>
    %34 = tpu.matmul %32, %33, %cst_20 {dimension_numbers = #tpu.dot_dimension_numbers<[1], [0], [0], [1], [0, 0, 1, 1], [], []>} : vector<16x8xbf16>, vector<8x8xbf16>, vector<16x8xf32> -> vector<16x8xf32>
    %35 = arith.addf %31, %34 : vector<16x8xf32>
    %c0_21 = arith.constant 0 : index
    %c0_22 = arith.constant 0 : index
    %36 = vector.load %arg9[%c0_21, %c0_22] : memref<16x32xf32, #tpu.memory_space<vmem>>, vector<16x8xf32>
    tpu.vector_store %arg9[%c0_21, %c0_22], %35 {strides = array<i32>} : memref<16x32xf32, #tpu.memory_space<vmem>>, vector<16x8xf32>,
    %c0_23 = arith.constant 0 : index
    %c0_24 = arith.constant 0 : index
    %37 = vector.load %arg7[%c0_23, %c0_24] : memref<16x4xf32, #tpu.memory_space<vmem>>, vector<16x1xf32>
    tpu.vector_store %arg7[%c0_23, %c0_24], %17 {strides = array<i32>} : memref<16x4xf32, #tpu.memory_space<vmem>>, vector<16x1xf32>,
    %38 = vector.extract_strided_slice %4 {offsets = [0, 8], sizes = [16, 8], strides = [1, 1]} : vector<16x32xbf16> to vector<16x8xbf16>
    %39 = vector.extract_strided_slice %6 {offsets = [0, 8], sizes = [8, 8], strides = [1, 1]} : vector<8x32xbf16> to vector<8x8xbf16>
    %cst_25 = arith.constant dense<0.000000e+00> : vector<16x8xf32>
    %40 = tpu.matmul %38, %39, %cst_25 {dimension_numbers = #tpu.dot_dimension_numbers<[1], [1], [0], [0], [0, 0, 1, 0], [], []>} : vector<16x8xbf16>, vector<8x8xbf16>, vector<16x8xf32> -> vector<16x8xf32>
    %cst_26 = arith.constant 0.353553385 : f32
    %41 = vector.broadcast %cst_26 : f32 to vector<16x8xf32>
    %42 = arith.mulf %40, %41 : vector<16x8xf32>
    %c0_27 = arith.constant 0 : index
    %c1 = arith.constant 1 : index
    %43 = vector.load %arg7[%c0_27, %c1] : memref<16x4xf32, #tpu.memory_space<vmem>>, vector<16x1xf32>
    %cst_28 = arith.constant dense<0xFF800000> : vector<16xf32>
    %44 = vector.multi_reduction <maximumf>, %42, %cst_28 [1] : vector<16x8xf32> to vector<16xf32>
    %45 = vector.shape_cast %44 : vector<16xf32> to vector<16x1xf32>
    %46 = arith.maximumf %43, %45 : vector<16x1xf32>
    %47 = arith.subf %43, %46 : vector<16x1xf32>
    %48 = math.exp %47 : vector<16x1xf32>
    %49 = vector.broadcast %46 : vector<16x1xf32> to vector<16x8xf32>
    %50 = arith.subf %42, %49 : vector<16x8xf32>
    %51 = math.exp %50 : vector<16x8xf32>
    %c0_29 = arith.constant 0 : index
    %c1_30 = arith.constant 1 : index
    %52 = vector.load %arg8[%c0_29, %c1_30] : memref<16x4xf32, #tpu.memory_space<vmem>>, vector<16x1xf32>
    %53 = arith.mulf %48, %52 : vector<16x1xf32>
    %cst_31 = arith.constant dense<0.000000e+00> : vector<16xf32>
    %54 = vector.multi_reduction <add>, %51, %cst_31 [1] : vector<16x8xf32> to vector<16xf32>
    %55 = vector.shape_cast %54 : vector<16xf32> to vector<16x1xf32>
    %56 = arith.addf %53, %55 : vector<16x1xf32>
    %c0_32 = arith.constant 0 : index
    %c1_33 = arith.constant 1 : index
    %57 = vector.load %arg8[%c0_32, %c1_33] : memref<16x4xf32, #tpu.memory_space<vmem>>, vector<16x1xf32>
    tpu.vector_store %arg8[%c0_32, %c1_33], %56 {strides = array<i32>} : memref<16x4xf32, #tpu.memory_space<vmem>>, vector<16x1xf32>,
    %c0_34 = arith.constant 0 : index
    %c8 = arith.constant 8 : index
    %58 = vector.load %arg9[%c0_34, %c8] : memref<16x32xf32, #tpu.memory_space<vmem>>, vector<16x8xf32>
    %59 = vector.broadcast %48 : vector<16x1xf32> to vector<16x8xf32>
    %60 = arith.mulf %59, %58 : vector<16x8xf32>
    %61 = arith.truncf %51 : vector<16x8xf32> to vector<16x8xbf16>
    %62 = vector.extract_strided_slice %8 {offsets = [0, 8], sizes = [8, 8], strides = [1, 1]} : vector<8x32xbf16> to vector<8x8xbf16>
    %cst_35 = arith.constant dense<0.000000e+00> : vector<16x8xf32>
    %63 = tpu.matmul %61, %62, %cst_35 {dimension_numbers = #tpu.dot_dimension_numbers<[1], [0], [0], [1], [0, 0, 1, 1], [], []>} : vector<16x8xbf16>, vector<8x8xbf16>, vector<16x8xf32> -> vector<16x8xf32>
    %64 = arith.addf %60, %63 : vector<16x8xf32>
    %c0_36 = arith.constant 0 : index
    %c8_37 = arith.constant 8 : index
    %65 = vector.load %arg9[%c0_36, %c8_37] : memref<16x32xf32, #tpu.memory_space<vmem>>, vector<16x8xf32>
    tpu.vector_store %arg9[%c0_36, %c8_37], %64 {strides = array<i32>} : memref<16x32xf32, #tpu.memory_space<vmem>>, vector<16x8xf32>,
    %c0_38 = arith.constant 0 : index
    %c1_39 = arith.constant 1 : index
    %66 = vector.load %arg7[%c0_38, %c1_39] : memref<16x4xf32, #tpu.memory_space<vmem>>, vector<16x1xf32>
    tpu.vector_store %arg7[%c0_38, %c1_39], %46 {strides = array<i32>} : memref<16x4xf32, #tpu.memory_space<vmem>>, vector<16x1xf32>,
    %67 = vector.extract_strided_slice %4 {offsets = [0, 16], sizes = [16, 8], strides = [1, 1]} : vector<16x32xbf16> to vector<16x8xbf16>
    %68 = vector.extract_strided_slice %6 {offsets = [0, 16], sizes = [8, 8], strides = [1, 1]} : vector<8x32xbf16> to vector<8x8xbf16>
    %cst_40 = arith.constant dense<0.000000e+00> : vector<16x8xf32>
    %69 = tpu.matmul %67, %68, %cst_40 {dimension_numbers = #tpu.dot_dimension_numbers<[1], [1], [0], [0], [0, 0, 1, 0], [], []>} : vector<16x8xbf16>, vector<8x8xbf16>, vector<16x8xf32> -> vector<16x8xf32>
    %cst_41 = arith.constant 0.353553385 : f32
    %70 = vector.broadcast %cst_41 : f32 to vector<16x8xf32>
    %71 = arith.mulf %69, %70 : vector<16x8xf32>
    %c0_42 = arith.constant 0 : index
    %c2 = arith.constant 2 : index
    %72 = vector.load %arg7[%c0_42, %c2] : memref<16x4xf32, #tpu.memory_space<vmem>>, vector<16x1xf32>
    %cst_43 = arith.constant dense<0xFF800000> : vector<16xf32>
    %73 = vector.multi_reduction <maximumf>, %71, %cst_43 [1] : vector<16x8xf32> to vector<16xf32>
    %74 = vector.shape_cast %73 : vector<16xf32> to vector<16x1xf32>
    %75 = arith.maximumf %72, %74 : vector<16x1xf32>
    %76 = arith.subf %72, %75 : vector<16x1xf32>
    %77 = math.exp %76 : vector<16x1xf32>
    %78 = vector.broadcast %75 : vector<16x1xf32> to vector<16x8xf32>
    %79 = arith.subf %71, %78 : vector<16x8xf32>
    %80 = math.exp %79 : vector<16x8xf32>
    %c0_44 = arith.constant 0 : index
    %c2_45 = arith.constant 2 : index
    %81 = vector.load %arg8[%c0_44, %c2_45] : memref<16x4xf32, #tpu.memory_space<vmem>>, vector<16x1xf32>
    %82 = arith.mulf %77, %81 : vector<16x1xf32>
    %cst_46 = arith.constant dense<0.000000e+00> : vector<16xf32>
    %83 = vector.multi_reduction <add>, %80, %cst_46 [1] : vector<16x8xf32> to vector<16xf32>
    %84 = vector.shape_cast %83 : vector<16xf32> to vector<16x1xf32>
    %85 = arith.addf %82, %84 : vector<16x1xf32>
    %c0_47 = arith.constant 0 : index
    %c2_48 = arith.constant 2 : index
    %86 = vector.load %arg8[%c0_47, %c2_48] : memref<16x4xf32, #tpu.memory_space<vmem>>, vector<16x1xf32>
    tpu.vector_store %arg8[%c0_47, %c2_48], %85 {strides = array<i32>} : memref<16x4xf32, #tpu.memory_space<vmem>>, vector<16x1xf32>,
    %c0_49 = arith.constant 0 : index
    %c16 = arith.constant 16 : index
    %87 = vector.load %arg9[%c0_49, %c16] : memref<16x32xf32, #tpu.memory_space<vmem>>, vector<16x8xf32>
    %88 = vector.broadcast %77 : vector<16x1xf32> to vector<16x8xf32>
    %89 = arith.mulf %88, %87 : vector<16x8xf32>
    %90 = arith.truncf %80 : vector<16x8xf32> to vector<16x8xbf16>
    %91 = vector.extract_strided_slice %8 {offsets = [0, 16], sizes = [8, 8], strides = [1, 1]} : vector<8x32xbf16> to vector<8x8xbf16>
    %cst_50 = arith.constant dense<0.000000e+00> : vector<16x8xf32>
    %92 = tpu.matmul %90, %91, %cst_50 {dimension_numbers = #tpu.dot_dimension_numbers<[1], [0], [0], [1], [0, 0, 1, 1], [], []>} : vector<16x8xbf16>, vector<8x8xbf16>, vector<16x8xf32> -> vector<16x8xf32>
    %93 = arith.addf %89, %92 : vector<16x8xf32>
    %c0_51 = arith.constant 0 : index
    %c16_52 = arith.constant 16 : index
    %94 = vector.load %arg9[%c0_51, %c16_52] : memref<16x32xf32, #tpu.memory_space<vmem>>, vector<16x8xf32>
    tpu.vector_store %arg9[%c0_51, %c16_52], %93 {strides = array<i32>} : memref<16x32xf32, #tpu.memory_space<vmem>>, vector<16x8xf32>,
    %c0_53 = arith.constant 0 : index
    %c2_54 = arith.constant 2 : index
    %95 = vector.load %arg7[%c0_53, %c2_54] : memref<16x4xf32, #tpu.memory_space<vmem>>, vector<16x1xf32>
    tpu.vector_store %arg7[%c0_53, %c2_54], %75 {strides = array<i32>} : memref<16x4xf32, #tpu.memory_space<vmem>>, vector<16x1xf32>,
    %96 = vector.extract_strided_slice %4 {offsets = [0, 24], sizes = [16, 8], strides = [1, 1]} : vector<16x32xbf16> to vector<16x8xbf16>
    %97 = vector.extract_strided_slice %6 {offsets = [0, 24], sizes = [8, 8], strides = [1, 1]} : vector<8x32xbf16> to vector<8x8xbf16>
    %cst_55 = arith.constant dense<0.000000e+00> : vector<16x8xf32>
    %98 = tpu.matmul %96, %97, %cst_55 {dimension_numbers = #tpu.dot_dimension_numbers<[1], [1], [0], [0], [0, 0, 1, 0], [], []>} : vector<16x8xbf16>, vector<8x8xbf16>, vector<16x8xf32> -> vector<16x8xf32>
    %cst_56 = arith.constant 0.353553385 : f32
    %99 = vector.broadcast %cst_56 : f32 to vector<16x8xf32>
    %100 = arith.mulf %98, %99 : vector<16x8xf32>
    %c0_57 = arith.constant 0 : index
    %c3 = arith.constant 3 : index
    %101 = vector.load %arg7[%c0_57, %c3] : memref<16x4xf32, #tpu.memory_space<vmem>>, vector<16x1xf32>
    %cst_58 = arith.constant dense<0xFF800000> : vector<16xf32>
    %102 = vector.multi_reduction <maximumf>, %100, %cst_58 [1] : vector<16x8xf32> to vector<16xf32>
    %103 = vector.shape_cast %102 : vector<16xf32> to vector<16x1xf32>
    %104 = arith.maximumf %101, %103 : vector<16x1xf32>
    %105 = arith.subf %101, %104 : vector<16x1xf32>
    %106 = math.exp %105 : vector<16x1xf32>
    %107 = vector.broadcast %104 : vector<16x1xf32> to vector<16x8xf32>
    %108 = arith.subf %100, %107 : vector<16x8xf32>
    %109 = math.exp %108 : vector<16x8xf32>
    %c0_59 = arith.constant 0 : index
    %c3_60 = arith.constant 3 : index
    %110 = vector.load %arg8[%c0_59, %c3_60] : memref<16x4xf32, #tpu.memory_space<vmem>>, vector<16x1xf32>
    %111 = arith.mulf %106, %110 : vector<16x1xf32>
    %cst_61 = arith.constant dense<0.000000e+00> : vector<16xf32>
    %112 = vector.multi_reduction <add>, %109, %cst_61 [1] : vector<16x8xf32> to vector<16xf32>
    %113 = vector.shape_cast %112 : vector<16xf32> to vector<16x1xf32>
    %114 = arith.addf %111, %113 : vector<16x1xf32>
    %c0_62 = arith.constant 0 : index
    %c3_63 = arith.constant 3 : index
    %115 = vector.load %arg8[%c0_62, %c3_63] : memref<16x4xf32, #tpu.memory_space<vmem>>, vector<16x1xf32>
    tpu.vector_store %arg8[%c0_62, %c3_63], %114 {strides = array<i32>} : memref<16x4xf32, #tpu.memory_space<vmem>>, vector<16x1xf32>,
    %c0_64 = arith.constant 0 : index
    %c24 = arith.constant 24 : index
    %116 = vector.load %arg9[%c0_64, %c24] : memref<16x32xf32, #tpu.memory_space<vmem>>, vector<16x8xf32>
    %117 = vector.broadcast %106 : vector<16x1xf32> to vector<16x8xf32>
    %118 = arith.mulf %117, %116 : vector<16x8xf32>
    %119 = arith.truncf %109 : vector<16x8xf32> to vector<16x8xbf16>
    %120 = vector.extract_strided_slice %8 {offsets = [0, 24], sizes = [8, 8], strides = [1, 1]} : vector<8x32xbf16> to vector<8x8xbf16>
    %cst_65 = arith.constant dense<0.000000e+00> : vector<16x8xf32>
    %121 = tpu.matmul %119, %120, %cst_65 {dimension_numbers = #tpu.dot_dimension_numbers<[1], [0], [0], [1], [0, 0, 1, 1], [], []>} : vector<16x8xbf16>, vector<8x8xbf16>, vector<16x8xf32> -> vector<16x8xf32>
    %122 = arith.addf %118, %121 : vector<16x8xf32>
    %c0_66 = arith.constant 0 : index
    %c24_67 = arith.constant 24 : index
    %123 = vector.load %arg9[%c0_66, %c24_67] : memref<16x32xf32, #tpu.memory_space<vmem>>, vector<16x8xf32>
    tpu.vector_store %arg9[%c0_66, %c24_67], %122 {strides = array<i32>} : memref<16x32xf32, #tpu.memory_space<vmem>>, vector<16x8xf32>,
    %c0_68 = arith.constant 0 : index
    %c3_69 = arith.constant 3 : index
    %124 = vector.load %arg7[%c0_68, %c3_69] : memref<16x4xf32, #tpu.memory_space<vmem>>, vector<16x1xf32>
    tpu.vector_store %arg7[%c0_68, %c3_69], %104 {strides = array<i32>} : memref<16x4xf32, #tpu.memory_space<vmem>>, vector<16x1xf32>,
    %c0_i32_70 = arith.constant 0 : i32
    %125 = arith.cmpi eq, %arg2, %c0_i32_70 : i32
    %126 = arith.extui %125 : i1 to i32
    %c0_i32_71 = arith.constant 0 : i32
    %127 = arith.cmpi ne, %126, %c0_i32_71 : i32
    scf.if %127 {
      %c0_72 = arith.constant 0 : index
      %c0_73 = arith.constant 0 : index
      %128 = vector.load %arg8[%c0_72, %c0_73] : memref<16x4xf32, #tpu.memory_space<vmem>>, vector<16x1xf32>
      %129 = tpu.reciprocal %128 {approx = true} : vector<16x1xf32> -> vector<16x1xf32>
      %c0_74 = arith.constant 0 : index
      %c0_75 = arith.constant 0 : index
      %130 = vector.load %arg9[%c0_74, %c0_75] : memref<16x32xf32, #tpu.memory_space<vmem>>, vector<16x8xf32>
      %131 = vector.broadcast %129 : vector<16x1xf32> to vector<16x8xf32>
      %132 = arith.mulf %130, %131 : vector<16x8xf32>
      %c0_76 = arith.constant 0 : index
      %c1_77 = arith.constant 1 : index
      %133 = vector.load %arg8[%c0_76, %c1_77] : memref<16x4xf32, #tpu.memory_space<vmem>>, vector<16x1xf32>
      %134 = tpu.reciprocal %133 {approx = true} : vector<16x1xf32> -> vector<16x1xf32>
      %c0_78 = arith.constant 0 : index
      %c8_79 = arith.constant 8 : index
      %135 = vector.load %arg9[%c0_78, %c8_79] : memref<16x32xf32, #tpu.memory_space<vmem>>, vector<16x8xf32>
      %136 = vector.broadcast %134 : vector<16x1xf32> to vector<16x8xf32>
      %137 = arith.mulf %135, %136 : vector<16x8xf32>
      %c0_80 = arith.constant 0 : index
      %c2_81 = arith.constant 2 : index
      %138 = vector.load %arg8[%c0_80, %c2_81] : memref<16x4xf32, #tpu.memory_space<vmem>>, vector<16x1xf32>
      %139 = tpu.reciprocal %138 {approx = true} : vector<16x1xf32> -> vector<16x1xf32>
      %c0_82 = arith.constant 0 : index
      %c16_83 = arith.constant 16 : index
      %140 = vector.load %arg9[%c0_82, %c16_83] : memref<16x32xf32, #tpu.memory_space<vmem>>, vector<16x8xf32>
      %141 = vector.broadcast %139 : vector<16x1xf32> to vector<16x8xf32>
      %142 = arith.mulf %140, %141 : vector<16x8xf32>
      %c0_84 = arith.constant 0 : index
      %c3_85 = arith.constant 3 : index
      %143 = vector.load %arg8[%c0_84, %c3_85] : memref<16x4xf32, #tpu.memory_space<vmem>>, vector<16x1xf32>
      %144 = tpu.reciprocal %143 {approx = true} : vector<16x1xf32> -> vector<16x1xf32>
      %c0_86 = arith.constant 0 : index
      %c24_87 = arith.constant 24 : index
      %145 = vector.load %arg9[%c0_86, %c24_87] : memref<16x32xf32, #tpu.memory_space<vmem>>, vector<16x8xf32>
      %146 = vector.broadcast %144 : vector<16x1xf32> to vector<16x8xf32>
      %147 = arith.mulf %145, %146 : vector<16x8xf32>
      %148 = tpu.concatenate %132, %137, %142, %147 in 1 : vector<16x8xf32>, vector<16x8xf32>, vector<16x8xf32>, vector<16x8xf32> -> vector<16x32xf32>
      %149 = arith.truncf %148 : vector<16x32xf32> to vector<16x32xbf16>
      %c0_88 = arith.constant 0 : index
      %c0_89 = arith.constant 0 : index
      %c0_90 = arith.constant 0 : index
      %150 = vector.load %arg6[%c0_88, %c0_89, %c0_90] : memref<1x16x32xbf16, #tpu.memory_space<vmem>>, vector<1x16x32xbf16>
      %151 = vector.shape_cast %150 : vector<1x16x32xbf16> to vector<16x32xbf16>
      %152 = vector.shape_cast %149 : vector<16x32xbf16> to vector<1x16x32xbf16>
      tpu.vector_store %arg6[%c0_88, %c0_89, %c0_90], %152 {strides = array<i32>} : memref<1x16x32xbf16, #tpu.memory_space<vmem>>, vector<1x16x32xbf16>,
    } else {
    }
    return
  }
  func.func @transform_0(%arg0: i32, %arg1: i32, %arg2: i32) -> (i32, i32, i32) {
    %c0_i32 = arith.constant 0 : i32
    %c0_i32_0 = arith.constant 0 : i32
    return %arg0, %arg1, %c0_i32 : i32, i32, i32
  }
  func.func @transform_1(%arg0: i32, %arg1: i32, %arg2: i32) -> (i32, i32, i32) {
    %c0_i32 = arith.constant 0 : i32
    %c0_i32_0 = arith.constant 0 : i32
    return %arg0, %arg2, %c0_i32 : i32, i32, i32
  }
  func.func @transform_2(%arg0: i32, %arg1: i32, %arg2: i32) -> (i32, i32, i32) {
    %c0_i32 = arith.constant 0 : i32
    %c0_i32_0 = arith.constant 0 : i32
    return %arg0, %arg2, %c0_i32 : i32, i32, i32
  }
  func.func @transform_3(%arg0: i32, %arg1: i32, %arg2: i32) -> (i32, i32, i32) {
    %c0_i32 = arith.constant 0 : i32
    %c0_i32_0 = arith.constant 0 : i32
    return %arg0, %arg1, %c0_i32 : i32, i32, i32
  }
}

</mosaic_0001>

<llo_original>
// kernel: modulated_cross_attention.5
$region0: #{modulated_cross_attention.5}
  #allocation0 [shape = 'u32[]', space=smem, size = 0x4, offset = 0x4, fixed_abs, tag = 'smem constant byte address 0x4 - core index']
  #allocation1 [shape = 'u32[144,128]{1,0:T(1,128)}', space=vmem, size = 0x12000, scoped, tag = 'internal scratch']
  #allocation2 [shape = 'f32[32,32]{1,0:T(8,128)}', space=vmem, size = 0x4000, scoped, tag = 'scratch operand']
  %s0 = inlined_call_operand.vmem [shape: bf16[32,32], index: 0, kind: input, shape index: {}]
  %s1 = inlined_call_operand.vmem [shape: bf16[32,32], index: 1, kind: input, shape index: {}]
  %s2 = inlined_call_operand.vmem [shape: bf16[32,32], index: 2, kind: output, shape index: {}]
  %s3 = sld [smem:[#allocation0]]
  $region26: #{modulated_cross_attention.5} parent=0
    _
  %s5 = ssub.s32 1, %s3
  %s6 = scalar_select 0, %s5, %s3
  // Predicated region
  $region2: #{modulated_cross_attention.5} parent=0 // pred_check
    _
  $region3: #{modulated_cross_attention.5} parent=0 // pred_check_branch
    %8 = sbr.rel (0) target = $region5
  $region4: #{modulated_cross_attention.5} parent=0 // pred_region
    _
  $region5: #{modulated_cross_attention.5} parent=0 // pred_fallthru
    _
  // Predicated region
  $region6: #{modulated_cross_attention.5} parent=0 // pred_check
    _
  $region7: #{modulated_cross_attention.5} parent=0 // pred_check_branch
    %10 = sbr.rel (0) target = $region9
  $region8: #{modulated_cross_attention.5} parent=0 // pred_region
    _
  $region9: #{modulated_cross_attention.5} parent=0 // pred_fallthru
    _
  %p12 = scmp.eq.s32.totalorder 0, 0
  // Predicated region
  $region10: #{modulated_cross_attention.5} parent=0 // pred_check
    %p13 = pneg %p12
  $region11: #{modulated_cross_attention.5} parent=0 // pred_check_branch
    %15 = sbr.rel (%p13) target = $region13
  $region12: #{modulated_cross_attention.5} parent=0 // pred_region
    %vm16 = vcmask 261120
    %17 = vst.msk [vmem:[#allocation2] sm:$0xff] %vm16, 0.0
    %18 = vst.msk [vmem:[#allocation2 + $0x8] sm:$0xff] %vm16, 0.0
    %19 = vst.msk [vmem:[#allocation2 + $0x10] sm:$0xff] %vm16, 0.0
    %20 = vst.msk [vmem:[#allocation2 + $0x18] sm:$0xff] %vm16, 0.0
  $region13: #{modulated_cross_attention.5} parent=0 // pred_fallthru
    _
  %v21 = vld [vmem:[#allocation2] sm:$0xff]
  %v22 = vld [vmem:[#allocation2 + $0x8] sm:$0xff]
  %v23 = vld [vmem:[#allocation2 + $0x10] sm:$0xff]
  %v24 = vld [vmem:[#allocation2 + $0x18] sm:$0xff]
  %v25 = vld [vmem:[%s0] sm:$0xf]
  %v26 = vld [vmem:[%s0 + $0x4] sm:$0xf]
  %v27 = vld [vmem:[%s0 + $0x8] sm:$0xf]
  %v28 = vld [vmem:[%s0 + $0xc] sm:$0xf]
  %v29 = vld [vmem:[%s1] sm:$0xf]
  %v30 = vld [vmem:[%s1 + $0x4] sm:$0xf]
  %v31 = vld [vmem:[%s1 + $0x8] sm:$0xf]
  %v32 = vld [vmem:[%s1 + $0xc] sm:$0xf]
  %v37 = vunpack.c.l.b16 %v25
  %v38 = vunpack.c.l.b16 %v26
  %v39 = vunpack.c.l.b16 %v27
  %v40 = vunpack.c.l.b16 %v28
  %v41 = vpack.c.b16 %v38, %v37
  %v42 = vpack.c.b16 %v40, %v39
  %v47 = vunpack.c.l.b16 %v29
  %v48 = vunpack.c.l.b16 %v30
  %v49 = vunpack.c.l.b16 %v31
  %v50 = vunpack.c.l.b16 %v32
  %v51 = vpack.c.b16 %v48, %v47
  %v52 = vpack.c.b16 %v50, %v49
  %vm55 = vcmask 261120
  %v57 = vsel %vm55, %v41, 0
  %v60 = vsel %vm55, %v42, 0
  %62 = vmatprep.subr.bf16.mxu0 0
  %63 = vmatpush1.bf16.msra.mxu0 %v51
  %64 = vmatprep.subr.bf16.mxu0 0
  %65 = vmatpush1.bf16.msra.mxu0 %v52
  %66 = vmatprep.subr.bf16.mxu0 0
  %67 = vmatpush1.bf16.msra.mxu0 0
  %68 = vmatprep.subr.bf16.mxu0 0
  %69 = vmatpush1.bf16.msra.mxu0 0
  %70 = vmatprep.subr.bf16.mxu0 0
  %71 = vmatpush1.bf16.msra.mxu0 0
  %72 = vmatprep.subr.bf16.mxu0 0
  %73 = vmatpush1.bf16.msra.mxu0 0
  %74 = vmatprep.subr.bf16.mxu0 0
  %75 = vmatpush1.bf16.msra.mxu0 0
  %76 = vmatprep.subr.bf16.mxu0 0
  %77 = vmatpush1.bf16.msra.mxu0 0
  %78 = vmatprep.subr.bf16.mxu0 0
  %79 = vmatpush1.bf16.msra.mxu0 0
  %80 = vmatprep.subr.bf16.mxu0 0
  %81 = vmatpush1.bf16.msra.mxu0 0
  %82 = vmatprep.subr.bf16.mxu0 0
  %83 = vmatpush1.bf16.msra.mxu0 0
  %84 = vmatprep.subr.bf16.mxu0 0
  %85 = vmatpush1.bf16.msra.mxu0 0
  %86 = vmatprep.subr.bf16.mxu0 0
  %87 = vmatpush1.bf16.msra.mxu0 0
  %88 = vmatprep.subr.bf16.mxu0 0
  %89 = vmatpush1.bf16.msra.mxu0 0
  %90 = vmatprep.subr.bf16.mxu0 0
  %91 = vmatpush1.bf16.msra.mxu0 0
  %92 = vmatprep.subr.bf16.mxu0 0
  %93 = vmatpush1.bf16.msra.mxu0 0
  %94 = vmatprep.mubr.bf16.mxu0 0
  %95 = vmatmul.mubr.bf16.gmra.mrb[0].mxu0 %v57
  %v96 = vpop.f32.mrb[0].mxu0
  %v97 = vadd.f32 0.0, %v96
  %v98 = vpop.f32.mrb[0].mxu0
  %v99 = vpop.f32.mrb[0].mxu0
  %v100 = vadd.f32 0.0, %v99
  %v101 = vpop.f32.mrb[0].mxu0
  %102 = vmatprep.mubr.bf16.mxu0 0
  %103 = vmatmul.mubr.bf16.gmra.mrb[0].mxu0 %v60
  %v104 = vpop.f32.mrb[0].mxu0
  %v105 = vadd.f32 0.0, %v104
  %v106 = vpop.f32.mrb[0].mxu0
  %v107 = vpop.f32.mrb[0].mxu0
  %v108 = vadd.f32 0.0, %v107
  %v109 = vpop.f32.mrb[0].mxu0
  %110 = vdwg.mxu0
  %v111 = vadd.f32 %v21, %v97
  %v112 = vadd.f32 %v22, %v100
  %v113 = vadd.f32 %v23, %v105
  %v114 = vadd.f32 %v24, %v108
  %115 = vst.msk [vmem:[#allocation2] sm:$0xff] %vm55, %v111
  %116 = vst.msk [vmem:[#allocation2 + $0x8] sm:$0xff] %vm55, %v112
  %117 = vst.msk [vmem:[#allocation2 + $0x10] sm:$0xff] %vm55, %v113
  %118 = vst.msk [vmem:[#allocation2 + $0x18] sm:$0xff] %vm55, %v114
  // Predicated region
  $region14: #{modulated_cross_attention.5} parent=0 // pred_check
    %p119 = pneg %p12
  $region15: #{modulated_cross_attention.5} parent=0 // pred_check_branch
    %121 = sbr.rel (%p119) target = $region17
  $region16: #{modulated_cross_attention.5} parent=0 // pred_region
    %v122 = vld [vmem:[#allocation2] sm:$0xff]
    %v123 = vld [vmem:[#allocation2 + $0x8] sm:$0xff]
    %v124 = vld [vmem:[#allocation2 + $0x10] sm:$0xff]
    %v125 = vld [vmem:[#allocation2 + $0x18] sm:$0xff]
    %v126 = vpack.c.bf16 %v123, %v122
    %v127 = vpack.c.bf16 %v125, %v124
    %v130 = vunpack.c.l.b16 %v126
    %v131 = vunpack.c.h.b16 %v126
    %v132 = vunpack.c.l.b16 %v127
    %v133 = vunpack.c.h.b16 %v127
    %v134 = vpack.c.b16 %v130, %v130
    %v135 = vpack.c.b16 %v131, %v131
    %v136 = vpack.c.b16 %v132, %v132
    %v137 = vpack.c.b16 %v133, %v133
    %vm142 = vcmask 257024
    %143 = vst.msk [vmem:[%s2] sm:$0xf] %vm142, %v134
    %144 = vst.msk [vmem:[%s2 + $0x4] sm:$0xf] %vm142, %v135
    %145 = vst.msk [vmem:[%s2 + $0x8] sm:$0xf] %vm142, %v136
    %146 = vst.msk [vmem:[%s2 + $0xc] sm:$0xf] %vm142, %v137
  $region17: #{modulated_cross_attention.5} parent=0 // pred_fallthru
    _
  // Predicated region
  $region18: #{modulated_cross_attention.5} parent=0 // pred_check
    _
  $region19: #{modulated_cross_attention.5} parent=0 // pred_check_branch
    %148 = sbr.rel (0) target = $region21
  $region20: #{modulated_cross_attention.5} parent=0 // pred_region
    _
  $region21: #{modulated_cross_attention.5} parent=0 // pred_fallthru
    _
  // Predicated region
  $region22: #{modulated_cross_attention.5} parent=0 // pred_check
    _
  $region23: #{modulated_cross_attention.5} parent=0 // pred_check_branch
    %150 = sbr.rel (0) target = $region25
  $region24: #{modulated_cross_attention.5} parent=0 // pred_region
    _
  $region25: #{modulated_cross_attention.5} parent=0 // pred_fallthru
    _

// kernel: modulated_cross_attention.6
$region0: #{modulated_cross_attention.6}
  #allocation0 [shape = 'u32[]', space=smem, size = 0x4, offset = 0x4, fixed_abs, tag = 'smem constant byte address 0x4 - core index']
  #allocation1 [shape = 'u32[144,128]{1,0:T(1,128)}', space=vmem, size = 0x12000, scoped, tag = 'internal scratch']
  #allocation2 [shape = 'f32[16,32]{1,0:T(8,128)}', space=vmem, size = 0x2000, scoped, tag = 'scratch operand']
  %s0 = inlined_call_operand.vmem [shape: bf16[16,32], index: 0, kind: input, shape index: {}]
  %s1 = inlined_call_operand.vmem [shape: bf16[32,32], index: 1, kind: input, shape index: {}]
  %s2 = inlined_call_operand.vmem [shape: bf16[16,32], index: 2, kind: output, shape index: {}]
  %s3 = sld [smem:[#allocation0]]
  $region26: #{modulated_cross_attention.6} parent=0
    _
  %s5 = ssub.s32 1, %s3
  %s6 = scalar_select 0, %s5, %s3
  // Predicated region
  $region2: #{modulated_cross_attention.6} parent=0 // pred_check
    _
  $region3: #{modulated_cross_attention.6} parent=0 // pred_check_branch
    %8 = sbr.rel (0) target = $region5
  $region4: #{modulated_cross_attention.6} parent=0 // pred_region
    _
  $region5: #{modulated_cross_attention.6} parent=0 // pred_fallthru
    _
  // Predicated region
  $region6: #{modulated_cross_attention.6} parent=0 // pred_check
    _
  $region7: #{modulated_cross_attention.6} parent=0 // pred_check_branch
    %10 = sbr.rel (0) target = $region9
  $region8: #{modulated_cross_attention.6} parent=0 // pred_region
    _
  $region9: #{modulated_cross_attention.6} parent=0 // pred_fallthru
    _
  %p12 = scmp.eq.s32.totalorder 0, 0
  // Predicated region
  $region10: #{modulated_cross_attention.6} parent=0 // pred_check
    %p13 = pneg %p12
  $region11: #{modulated_cross_attention.6} parent=0 // pred_check_branch
    %15 = sbr.rel (%p13) target = $region13
  $region12: #{modulated_cross_attention.6} parent=0 // pred_region
    %vm16 = vcmask 261120
    %17 = vst.msk [vmem:[#allocation2] sm:$0xff] %vm16, 0.0
    %18 = vst.msk [vmem:[#allocation2 + $0x8] sm:$0xff] %vm16, 0.0
  $region13: #{modulated_cross_attention.6} parent=0 // pred_fallthru
    _
  %v19 = vld [vmem:[#allocation2] sm:$0xff]
  %v20 = vld [vmem:[#allocation2 + $0x8] sm:$0xff]
  %v21 = vld [vmem:[%s0] sm:$0xf]
  %v22 = vld [vmem:[%s0 + $0x4] sm:$0xf]
  %v23 = vld [vmem:[%s1] sm:$0xf]
  %v24 = vld [vmem:[%s1 + $0x4] sm:$0xf]
  %v25 = vld [vmem:[%s1 + $0x8] sm:$0xf]
  %v26 = vld [vmem:[%s1 + $0xc] sm:$0xf]
  %v29 = vunpack.c.l.b16 %v21
  %v30 = vunpack.c.l.b16 %v22
  %v31 = vpack.c.b16 %v30, %v29
  %v36 = vunpack.c.l.b16 %v23
  %v37 = vunpack.c.l.b16 %v24
  %v38 = vunpack.c.l.b16 %v25
  %v39 = vunpack.c.l.b16 %v26
  %v40 = vpack.c.b16 %v37, %v36
  %v41 = vpack.c.b16 %v39, %v38
  %vm44 = vcmask 261120
  %v46 = vsel %vm44, %v31, 0
  %48 = vmatprep.subr.bf16.mxu0 0
  %49 = vmatpush1.bf16.msra.mxu0 %v40
  %50 = vmatprep.subr.bf16.mxu0 0
  %51 = vmatpush1.bf16.msra.mxu0 %v41
  %52 = vmatprep.subr.bf16.mxu0 0
  %53 = vmatpush1.bf16.msra.mxu0 0
  %54 = vmatprep.subr.bf16.mxu0 0
  %55 = vmatpush1.bf16.msra.mxu0 0
  %56 = vmatprep.subr.bf16.mxu0 0
  %57 = vmatpush1.bf16.msra.mxu0 0
  %58 = vmatprep.subr.bf16.mxu0 0
  %59 = vmatpush1.bf16.msra.mxu0 0
  %60 = vmatprep.subr.bf16.mxu0 0
  %61 = vmatpush1.bf16.msra.mxu0 0
  %62 = vmatprep.subr.bf16.mxu0 0
  %63 = vmatpush1.bf16.msra.mxu0 0
  %64 = vmatprep.subr.bf16.mxu0 0
  %65 = vmatpush1.bf16.msra.mxu0 0
  %66 = vmatprep.subr.bf16.mxu0 0
  %67 = vmatpush1.bf16.msra.mxu0 0
  %68 = vmatprep.subr.bf16.mxu0 0
  %69 = vmatpush1.bf16.msra.mxu0 0
  %70 = vmatprep.subr.bf16.mxu0 0
  %71 = vmatpush1.bf16.msra.mxu0 0
  %72 = vmatprep.subr.bf16.mxu0 0
  %73 = vmatpush1.bf16.msra.mxu0 0
  %74 = vmatprep.subr.bf16.mxu0 0
  %75 = vmatpush1.bf16.msra.mxu0 0
  %76 = vmatprep.subr.bf16.mxu0 0
  %77 = vmatpush1.bf16.msra.mxu0 0
  %78 = vmatprep.subr.bf16.mxu0 0
  %79 = vmatpush1.bf16.msra.mxu0 0
  %80 = vmatprep.mubr.bf16.mxu0 0
  %81 = vmatmul.mubr.bf16.gmra.mrb[0].mxu0 %v46
  %v82 = vpop.f32.mrb[0].mxu0
  %v83 = vadd.f32 0.0, %v82
  %v84 = vpop.f32.mrb[0].mxu0
  %v85 = vpop.f32.mrb[0].mxu0
  %v86 = vadd.f32 0.0, %v85
  %v87 = vpop.f32.mrb[0].mxu0
  %88 = vdwg.mxu0
  %v89 = vadd.f32 %v19, %v83
  %v90 = vadd.f32 %v20, %v86
  %91 = vst.msk [vmem:[#allocation2] sm:$0xff] %vm44, %v89
  %92 = vst.msk [vmem:[#allocation2 + $0x8] sm:$0xff] %vm44, %v90
  // Predicated region
  $region14: #{modulated_cross_attention.6} parent=0 // pred_check
    %p93 = pneg %p12
  $region15: #{modulated_cross_attention.6} parent=0 // pred_check_branch
    %95 = sbr.rel (%p93) target = $region17
  $region16: #{modulated_cross_attention.6} parent=0 // pred_region
    %v96 = vld [vmem:[#allocation2] sm:$0xff]
    %v97 = vld [vmem:[#allocation2 + $0x8] sm:$0xff]
    %v98 = vpack.c.bf16 %v97, %v96
    %v100 = vunpack.c.l.b16 %v98
    %v101 = vunpack.c.h.b16 %v98
    %v102 = vpack.c.b16 %v100, %v100
    %v103 = vpack.c.b16 %v101, %v101
    %vm106 = vcmask 257024
    %107 = vst.msk [vmem:[%s2] sm:$0xf] %vm106, %v102
    %108 = vst.msk [vmem:[%s2 + $0x4] sm:$0xf] %vm106, %v103
  $region17: #{modulated_cross_attention.6} parent=0 // pred_fallthru
    _
  // Predicated region
  $region18: #{modulated_cross_attention.6} parent=0 // pred_check
    _
  $region19: #{modulated_cross_attention.6} parent=0 // pred_check_branch
    %110 = sbr.rel (0) target = $region21
  $region20: #{modulated_cross_attention.6} parent=0 // pred_region
    _
  $region21: #{modulated_cross_attention.6} parent=0 // pred_fallthru
    _
  // Predicated region
  $region22: #{modulated_cross_attention.6} parent=0 // pred_check
    _
  $region23: #{modulated_cross_attention.6} parent=0 // pred_check_branch
    %112 = sbr.rel (0) target = $region25
  $region24: #{modulated_cross_attention.6} parent=0 // pred_region
    _
  $region25: #{modulated_cross_attention.6} parent=0 // pred_fallthru
    _

// kernel: modulated_cross_attention.9
$region0: #{modulated_cross_attention.9}
  #allocation0 [shape = 'u32[]', space=smem, size = 0x4, offset = 0x4, fixed_abs, tag = 'smem constant byte address 0x4 - core index']
  #allocation1 [shape = 'u32[144,128]{1,0:T(1,128)}', space=vmem, size = 0x12000, scoped, tag = 'internal scratch']
  #allocation2 [shape = 'f32[32,32]{1,0:T(8,128)}', space=vmem, size = 0x4000, scoped, tag = 'scratch operand']
  %s0 = inlined_call_operand.vmem [shape: bf16[32,32], index: 0, kind: input, shape index: {}]
  %s1 = inlined_call_operand.vmem [shape: bf16[32,32], index: 1, kind: input, shape index: {}]
  %s2 = inlined_call_operand.vmem [shape: f32[1,32], index: 2, kind: input, shape index: {}]
  %s3 = inlined_call_operand.hbm [shape: f32[32,32], index: 3, kind: output, shape index: {}]
  %s4 = sld [smem:[#allocation0]]
  $region30: #{modulated_cross_attention.9} parent=0
    _
  %s6 = ssub.s32 1, %s4
  %s7 = scalar_select 0, %s6, %s4
  $region1: #{modulated_cross_attention.9} parent=0
    #allocation3 [shape = 'u8[16384]{0}', space=vmem, size = 0x4000, scoped, tag = 'output window, operand 0, single buffered']
    #allocation4 [shape = 's32[1]{0}', space=sflag, size = 0x4, scoped, tag = 'scoped memory for modulated_cross_attention.9']
    %8 = vsyncpa [#allocation4], 0
    // Predicated region
    $region2: #{modulated_cross_attention.9} parent=1 // pred_check
      _
    $region3: #{modulated_cross_attention.9} parent=1 // pred_check_branch
      %10 = sbr.rel (0) target = $region5
    $region4: #{modulated_cross_attention.9} parent=1 // pred_region
      _
    $region5: #{modulated_cross_attention.9} parent=1 // pred_fallthru
      _
    // Predicated region
    $region6: #{modulated_cross_attention.9} parent=1 // pred_check
      _
    $region7: #{modulated_cross_attention.9} parent=1 // pred_check_branch
      %12 = sbr.rel (0) target = $region9
    $region8: #{modulated_cross_attention.9} parent=1 // pred_region
      _
    $region9: #{modulated_cross_attention.9} parent=1 // pred_fallthru
      _
    // Predicated region
    $region10: #{modulated_cross_attention.9} parent=1 // pred_check
      _
    $region11: #{modulated_cross_attention.9} parent=1 // pred_check_branch
      %14 = sbr.rel (0) target = $region13
    $region12: #{modulated_cross_attention.9} parent=1 // pred_region
      _
    $region13: #{modulated_cross_attention.9} parent=1 // pred_fallthru
      _
    %p16 = scmp.eq.s32.totalorder 0, 0
    // Predicated region
    $region14: #{modulated_cross_attention.9} parent=1 // pred_check
      %p17 = pneg %p16
    $region15: #{modulated_cross_attention.9} parent=1 // pred_check_branch
      %19 = sbr.rel (%p17) target = $region17
    $region16: #{modulated_cross_attention.9} parent=1 // pred_region
      %vm20 = vcmask 261120
      %21 = vst.msk [vmem:[#allocation2] sm:$0xff] %vm20, 0.0
      %22 = vst.msk [vmem:[#allocation2 + $0x8] sm:$0xff] %vm20, 0.0
      %23 = vst.msk [vmem:[#allocation2 + $0x10] sm:$0xff] %vm20, 0.0
      %24 = vst.msk [vmem:[#allocation2 + $0x18] sm:$0xff] %vm20, 0.0
    $region17: #{modulated_cross_attention.9} parent=1 // pred_fallthru
      _
    %v25 = vld [vmem:[#allocation2] sm:$0xff]
    %v26 = vld [vmem:[#allocation2 + $0x8] sm:$0xff]
    %v27 = vld [vmem:[#allocation2 + $0x10] sm:$0xff]
    %v28 = vld [vmem:[#allocation2 + $0x18] sm:$0xff]
    %v29 = vld [vmem:[%s0] sm:$0xf]
    %v30 = vld [vmem:[%s0 + $0x4] sm:$0xf]
    %v31 = vld [vmem:[%s0 + $0x8] sm:$0xf]
    %v32 = vld [vmem:[%s0 + $0xc] sm:$0xf]
    %v33 = vld [vmem:[%s1] sm:$0xf]
    %v34 = vld [vmem:[%s1 + $0x4] sm:$0xf]
    %v35 = vld [vmem:[%s1 + $0x8] sm:$0xf]
    %v36 = vld [vmem:[%s1 + $0xc] sm:$0xf]
    %v41 = vunpack.c.l.b16 %v29
    %v42 = vunpack.c.l.b16 %v30
    %v43 = vunpack.c.l.b16 %v31
    %v44 = vunpack.c.l.b16 %v32
    %v45 = vpack.c.b16 %v42, %v41
    %v46 = vpack.c.b16 %v44, %v43
    %v51 = vunpack.c.l.b16 %v33
    %v52 = vunpack.c.l.b16 %v34
    %v53 = vunpack.c.l.b16 %v35
    %v54 = vunpack.c.l.b16 %v36
    %v55 = vpack.c.b16 %v52, %v51
    %v56 = vpack.c.b16 %v54, %v53
    %vm59 = vcmask 261120
    %v61 = vsel %vm59, %v45, 0
    %v64 = vsel %vm59, %v46, 0
    %66 = vmatprep.subr.bf16.mxu0 0
    %67 = vmatpush1.bf16.msra.mxu0 %v55
    %68 = vmatprep.subr.bf16.mxu0 0
    %69 = vmatpush1.bf16.msra.mxu0 %v56
    %70 = vmatprep.subr.bf16.mxu0 0
    %71 = vmatpush1.bf16.msra.mxu0 0
    %72 = vmatprep.subr.bf16.mxu0 0
    %73 = vmatpush1.bf16.msra.mxu0 0
    %74 = vmatprep.subr.bf16.mxu0 0
    %75 = vmatpush1.bf16.msra.mxu0 0
    %76 = vmatprep.subr.bf16.mxu0 0
    %77 = vmatpush1.bf16.msra.mxu0 0
    %78 = vmatprep.subr.bf16.mxu0 0
    %79 = vmatpush1.bf16.msra.mxu0 0
    %80 = vmatprep.subr.bf16.mxu0 0
    %81 = vmatpush1.bf16.msra.mxu0 0
    %82 = vmatprep.subr.bf16.mxu0 0
    %83 = vmatpush1.bf16.msra.mxu0 0
    %84 = vmatprep.subr.bf16.mxu0 0
    %85 = vmatpush1.bf16.msra.mxu0 0
    %86 = vmatprep.subr.bf16.mxu0 0
    %87 = vmatpush1.bf16.msra.mxu0 0
    %88 = vmatprep.subr.bf16.mxu0 0
    %89 = vmatpush1.bf16.msra.mxu0 0
    %90 = vmatprep.subr.bf16.mxu0 0
    %91 = vmatpush1.bf16.msra.mxu0 0
    %92 = vmatprep.subr.bf16.mxu0 0
    %93 = vmatpush1.bf16.msra.mxu0 0
    %94 = vmatprep.subr.bf16.mxu0 0
    %95 = vmatpush1.bf16.msra.mxu0 0
    %96 = vmatprep.subr.bf16.mxu0 0
    %97 = vmatpush1.bf16.msra.mxu0 0
    %98 = vmatprep.mubr.bf16.mxu0 0
    %99 = vmatmul.mubr.bf16.gmra.mrb[0].mxu0 %v61
    %v100 = vpop.f32.mrb[0].mxu0
    %v101 = vadd.f32 0.0, %v100
    %v102 = vpop.f32.mrb[0].mxu0
    %v103 = vpop.f32.mrb[0].mxu0
    %v104 = vadd.f32 0.0, %v103
    %v105 = vpop.f32.mrb[0].mxu0
    %106 = vmatprep.mubr.bf16.mxu0 0
    %107 = vmatmul.mubr.bf16.gmra.mrb[0].mxu0 %v64
    %v108 = vpop.f32.mrb[0].mxu0
    %v109 = vadd.f32 0.0, %v108
    %v110 = vpop.f32.mrb[0].mxu0
    %v111 = vpop.f32.mrb[0].mxu0
    %v112 = vadd.f32 0.0, %v111
    %v113 = vpop.f32.mrb[0].mxu0
    %114 = vdwg.mxu0
    %v115 = vadd.f32 %v25, %v101
    %v116 = vadd.f32 %v26, %v104
    %v117 = vadd.f32 %v27, %v109
    %v118 = vadd.f32 %v28, %v112
    %119 = vst.msk [vmem:[#allocation2] sm:$0xff] %vm59, %v115
    %120 = vst.msk [vmem:[#allocation2 + $0x8] sm:$0xff] %vm59, %v116
    %121 = vst.msk [vmem:[#allocation2 + $0x10] sm:$0xff] %vm59, %v117
    %122 = vst.msk [vmem:[#allocation2 + $0x18] sm:$0xff] %vm59, %v118
    // Predicated region
    $region18: #{modulated_cross_attention.9} parent=1 // pred_check
      %p123 = pneg %p16
    $region19: #{modulated_cross_attention.9} parent=1 // pred_check_branch
      %125 = sbr.rel (%p123) target = $region21
    $region20: #{modulated_cross_attention.9} parent=1 // pred_region
      %v126 = vld [vmem:[#allocation2] sm:$0xff]
      %v127 = vld [vmem:[#allocation2 + $0x8] sm:$0xff]
      %v128 = vld [vmem:[#allocation2 + $0x10] sm:$0xff]
      %v129 = vld [vmem:[#allocation2 + $0x18] sm:$0xff]
      %v130 = vld [vmem:[%s2] sm:$0x1]
      %v132 = vlaneseq
      %v133 = vshrl.u32 %v132, 7
      %v134 = vsub.s32 0, %v133
      %v135 = vrot.slane %v130, %v134
      %v137 = vadd.f32 %v126, %v135
      %v138 = vadd.f32 %v127, %v135
      %v139 = vadd.f32 %v128, %v135
      %v140 = vadd.f32 %v129, %v135
      %141 = vst.msk [vmem:[#allocation3] sm:$0xff] %vm59, %v137
      %142 = vst.msk [vmem:[#allocation3 + $0x8] sm:$0xff] %vm59, %v138
      %143 = vst.msk [vmem:[#allocation3 + $0x10] sm:$0xff] %vm59, %v139
      %144 = vst.msk [vmem:[#allocation3 + $0x18] sm:$0xff] %vm59, %v140
    $region21: #{modulated_cross_attention.9} parent=1 // pred_fallthru
      _
    // Predicated region
    $region22: #{modulated_cross_attention.9} parent=1 // pred_check
      _
    $region23: #{modulated_cross_attention.9} parent=1 // pred_check_branch
      %146 = sbr.rel (0) target = $region25
    $region24: #{modulated_cross_attention.9} parent=1 // pred_region
      %s148 = ssub.s32 512, 512
      %149 = vsyncadd [#allocation4], %s148
      %s150 = sshll.u32 [#allocation3], 4
      %s151 = int_to_ptr.vmem [resolvable:$true] %s150
      %156 = dma.vmem_to_hbm [thread:$0]  %s151, 512, %s3, [#allocation4], 128, 128, 8
    $region25: #{modulated_cross_attention.9} parent=1 // pred_fallthru
      _
    // Predicated region
    $region26: #{modulated_cross_attention.9} parent=1 // pred_check
      _
    $region27: #{modulated_cross_attention.9} parent=1 // pred_check_branch
      %158 = sbr.rel (0) target = $region29
    $region28: #{modulated_cross_attention.9} parent=1 // pred_region
      %159 = dma.done [#allocation4], 512
    $region29: #{modulated_cross_attention.9} parent=1 // pred_fallthru
      _
    %160 = vsyncpa [#allocation4], 1

// kernel: modulated_cross_attention.8
$region0: #{modulated_cross_attention.8}
  #allocation0 [shape = 'u32[]', space=smem, size = 0x4, offset = 0x4, fixed_abs, tag = 'smem constant byte address 0x4 - core index']
  #allocation1 [shape = 'u32[144,128]{1,0:T(1,128)}', space=vmem, size = 0x12000, scoped, tag = 'internal scratch']
  #allocation2 [shape = 'f32[16,4]{1,0:T(8,128)}', space=vmem, size = 0x2000, scoped, tag = 'scratch operand']
  #allocation3 [shape = 'f32[16,4]{1,0:T(8,128)}', space=vmem, size = 0x2000, scoped, tag = 'scratch operand']
  #allocation4 [shape = 'f32[16,32]{1,0:T(8,128)}', space=vmem, size = 0x2000, scoped, tag = 'scratch operand']
  %s0 = inlined_call_operand.vmem [shape: bf16[2,16,32], index: 0, kind: input, shape index: {}]
  %s1 = inlined_call_operand.vmem [shape: bf16[2,8,32], index: 1, kind: input, shape index: {}]
  %s2 = inlined_call_operand.vmem [shape: bf16[2,8,32], index: 2, kind: input, shape index: {}]
  %s3 = inlined_call_operand.vmem [shape: bf16[2,16,32], index: 3, kind: output, shape index: {}]
  %s4 = sld [smem:[#allocation0]]
  $region53: #{modulated_cross_attention.8} parent=0
    _
  %s6 = ssub.s32 1, %s4
  %s7 = scalar_select 0, %s6, %s4
  loop: start=0, step=1, limit=4
  $region2: #{modulated_cross_attention.8} parent=0 // loop_pre_header
    _
  $region3: #{modulated_cross_attention.8} parent=0 // loop_header
    %s9 = sphi 0, %s13
    %p10 = scmp.ge.s32.totalorder %s9, 4
    %s16 = sphi 0, %s35
    %s17 = sphi 0, %s31
    %s18 = sphi 0, %s27
    %s19 = sphi 0, %s16
    %s20 = sphi 0, %s17
    %s21 = sphi 0, %s18
    %s22 = sphi 0, %s19
    %s23 = sphi 0, %s20
    %s24 = sphi 0, %s21
    %s40 = sphi 0, %s42
    %s43 = sphi 0, %s40
    %s44 = sphi 0, %s43
    %s60 = sphi 0, %s44
    %s68 = sphi 0, %s70
    %s71 = sphi 0, %s68
    %s72 = sphi 0, %s71
    %s88 = sphi 0, %s72
    %s96 = sphi 0, %s98
    %s99 = sphi 0, %s96
    %s100 = sphi 0, %s99
    %s116 = sphi 0, %s100
    %s124 = sphi 0, %s126
    %s127 = sphi 0, %s124
    %s128 = sphi 0, %s127
    %s144 = sphi 0, %s128
  $region4: #{modulated_cross_attention.8} parent=0 // loop_header_branch
    %12 = sbr.rel (%p10) target = $region8
  $region5: #{modulated_cross_attention.8} parent=0 // loop_body
    %s14 = ssub.s32 %s9, 1
    %s15 = ssub.s32 %s9, 2
    %s25 = sadd.s32 1, %s18
    %p26 = scmp.ge.s32.totalorder %s25, 1
    %s27 = scalar_select %p26, 0, %s25
    %s28 = sadd.s32 1, %s17
    %s29 = scalar_select %p26, %s28, %s17
    %p30 = scmp.ge.s32.totalorder %s29, 1
    %s31 = scalar_select %p30, 0, %s29
    %s32 = sadd.s32 1, %s16
    %s33 = scalar_select %p30, %s32, %s16
    %p34 = scmp.ge.s32.totalorder %s33, 2
    %s35 = scalar_select %p34, 0, %s33
    %s36 = ssub.s32 %s16, %s35
    %s37 = ssub.s32 %s17, %s31
    %s38 = sor.u32 %s36, %s37
    %p39 = scmp.eq.s32.totalorder %s38, 0
    %s41 = sadd.s32 %s40, 1
    %s42 = scalar_select %p39, %s40, %s41
    %p45 = pneg %p39
    %p46 = scmp.eq.s32.totalorder %s9, 1
    %p47 = por %p45, %p46
    %p48 = scmp.ne.s32.totalorder %s40, %s43
    %p49 = scmp.eq.s32.totalorder %s9, 0
    %p50 = por %p48, %p49
    %p51 = scmp.ne.s32.totalorder %s40, %s43
    %p52 = scmp.eq.s32.totalorder %s14, 1
    %p53 = por %p51, %p52
    %p54 = scmp.ne.s32.totalorder %s43, %s44
    %p55 = scmp.eq.s32.totalorder %s14, 0
    %p56 = por %p54, %p55
    %p57 = scmp.ne.s32.totalorder %s43, %s44
    %p58 = scmp.eq.s32.totalorder %s15, 1
    %p59 = por %p57, %p58
    %p61 = scmp.ne.s32.totalorder %s44, %s60
    %p62 = scmp.eq.s32.totalorder %s15, 0
    %p63 = por %p61, %p62
    %s64 = ssub.s32 %s16, %s35
    %s65 = ssub.s32 %s18, %s27
    %s66 = sor.u32 %s64, %s65
    %p67 = scmp.eq.s32.totalorder %s66, 0
    %s69 = sadd.s32 %s68, 1
    %s70 = scalar_select %p67, %s68, %s69
    %p73 = pneg %p67
    %p74 = scmp.eq.s32.totalorder %s9, 1
    %p75 = por %p73, %p74
    %p76 = scmp.ne.s32.totalorder %s68, %s71
    %p77 = scmp.eq.s32.totalorder %s9, 0
    %p78 = por %p76, %p77
    %p79 = scmp.ne.s32.totalorder %s68, %s71
    %p80 = scmp.eq.s32.totalorder %s14, 1
    %p81 = por %p79, %p80
    %p82 = scmp.ne.s32.totalorder %s71, %s72
    %p83 = scmp.eq.s32.totalorder %s14, 0
    %p84 = por %p82, %p83
    %p85 = scmp.ne.s32.totalorder %s71, %s72
    %p86 = scmp.eq.s32.totalorder %s15, 1
    %p87 = por %p85, %p86
    %p89 = scmp.ne.s32.totalorder %s72, %s88
    %p90 = scmp.eq.s32.totalorder %s15, 0
    %p91 = por %p89, %p90
    %s92 = ssub.s32 %s16, %s35
    %s93 = ssub.s32 %s18, %s27
    %s94 = sor.u32 %s92, %s93
    %p95 = scmp.eq.s32.totalorder %s94, 0
    %s97 = sadd.s32 %s96, 1
    %s98 = scalar_select %p95, %s96, %s97
    %p101 = pneg %p95
    %p102 = scmp.eq.s32.totalorder %s9, 1
    %p103 = por %p101, %p102
    %p104 = scmp.ne.s32.totalorder %s96, %s99
    %p105 = scmp.eq.s32.totalorder %s9, 0
    %p106 = por %p104, %p105
    %p107 = scmp.ne.s32.totalorder %s96, %s99
    %p108 = scmp.eq.s32.totalorder %s14, 1
    %p109 = por %p107, %p108
    %p110 = scmp.ne.s32.totalorder %s99, %s100
    %p111 = scmp.eq.s32.totalorder %s14, 0
    %p112 = por %p110, %p111
    %p113 = scmp.ne.s32.totalorder %s99, %s100
    %p114 = scmp.eq.s32.totalorder %s15, 1
    %p115 = por %p113, %p114
    %p117 = scmp.ne.s32.totalorder %s100, %s116
    %p118 = scmp.eq.s32.totalorder %s15, 0
    %p119 = por %p117, %p118
    %s120 = ssub.s32 %s16, %s35
    %s121 = ssub.s32 %s17, %s31
    %s122 = sor.u32 %s120, %s121
    %p123 = scmp.eq.s32.totalorder %s122, 0
    %s125 = sadd.s32 %s124, 1
    %s126 = scalar_select %p123, %s124, %s125
    %p129 = pneg %p123
    %p130 = scmp.eq.s32.totalorder %s9, 1
    %p131 = por %p129, %p130
    %p132 = scmp.ne.s32.totalorder %s124, %s127
    %p133 = scmp.eq.s32.totalorder %s9, 0
    %p134 = por %p132, %p133
    %p135 = scmp.ne.s32.totalorder %s124, %s127
    %p136 = scmp.eq.s32.totalorder %s14, 1
    %p137 = por %p135, %p136
    %p138 = scmp.ne.s32.totalorder %s127, %s128
    %p139 = scmp.eq.s32.totalorder %s14, 0
    %p140 = por %p138, %p139
    %p141 = scmp.ne.s32.totalorder %s127, %s128
    %p142 = scmp.eq.s32.totalorder %s15, 1
    %p143 = por %p141, %p142
    %p145 = scmp.ne.s32.totalorder %s128, %s144
    %p146 = scmp.eq.s32.totalorder %s15, 0
    %p147 = por %p145, %p146
    %p148 = scmp.le.s32.totalorder 1, %s9
    %p149 = scmp.lt.s32.totalorder %s9, 3
    %p150 = pnand %p148, %p149
    %p151 = pneg %p150
    // Predicated region
    $region9: #{modulated_cross_attention.8} parent=5 // pred_check
      _
    $region10: #{modulated_cross_attention.8} parent=5 // pred_check_branch
      %153 = sbr.rel (%p150) target = $region12
    $region11: #{modulated_cross_attention.8} parent=5 // pred_region
      %s154 = ssub.s32 %s9, 1
    $region12: #{modulated_cross_attention.8} parent=5 // pred_fallthru
      _
    %p155 = scmp.lt.s32.totalorder %s9, 2
    // Predicated region
    $region13: #{modulated_cross_attention.8} parent=5 // pred_check
      %p156 = pneg %p155
    $region14: #{modulated_cross_attention.8} parent=5 // pred_check_branch
      %158 = sbr.rel (%p156) target = $region16
    $region15: #{modulated_cross_attention.8} parent=5 // pred_region
      // Predicated region
      $region17: #{modulated_cross_attention.8} parent=15 // pred_check
        %p159 = pneg %p50
      $region18: #{modulated_cross_attention.8} parent=15 // pred_check_branch
        %161 = sbr.rel (%p159) target = $region20
      $region19: #{modulated_cross_attention.8} parent=15 // pred_region
        %s162 = smul.u32 2, %s17
        %p163 = scmp.lt.s32.totalorder %s16, 1
        %s164 = scalar_select %p163, %s16, 1
        %p165 = scmp.lt.s32.totalorder %s162, 1
        %s166 = scalar_select %p165, %s162, 1
        %s167 = smul.addr %s164, 2
        %s168 = sadd.s32 %s166, %s167
        %s169 = smul.addr %s168, 4
        %s170 = scalar_lea.vmem %s0, %s169
        %s171 = smul.u32 2, %s17
      $region20: #{modulated_cross_attention.8} parent=15 // pred_fallthru
        _
      // Predicated region
      $region21: #{modulated_cross_attention.8} parent=15 // pred_check
        %p172 = pneg %p78
      $region22: #{modulated_cross_attention.8} parent=15 // pred_check_branch
        %174 = sbr.rel (%p172) target = $region24
      $region23: #{modulated_cross_attention.8} parent=15 // pred_region
        %p175 = scmp.lt.s32.totalorder %s16, 1
        %s176 = scalar_select %p175, %s16, 1
        %p177 = scmp.lt.s32.totalorder %s18, 0
        %s178 = scalar_select %p177, %s18, 0
        %s179 = sadd.s32 %s178, %s176
        %s180 = smul.addr %s179, 4
        %s181 = scalar_lea.vmem %s1, %s180
      $region24: #{modulated_cross_attention.8} parent=15 // pred_fallthru
        _
      // Predicated region
      $region25: #{modulated_cross_attention.8} parent=15 // pred_check
        %p182 = pneg %p106
      $region26: #{modulated_cross_attention.8} parent=15 // pred_check_branch
        %184 = sbr.rel (%p182) target = $region28
      $region27: #{modulated_cross_attention.8} parent=15 // pred_region
        %p185 = scmp.lt.s32.totalorder %s16, 1
        %s186 = scalar_select %p185, %s16, 1
        %p187 = scmp.lt.s32.totalorder %s18, 0
        %s188 = scalar_select %p187, %s18, 0
        %s189 = sadd.s32 %s188, %s186
        %s190 = smul.addr %s189, 4
        %s191 = scalar_lea.vmem %s2, %s190
      $region28: #{modulated_cross_attention.8} parent=15 // pred_fallthru
        _
    $region16: #{modulated_cross_attention.8} parent=5 // pred_fallthru
      _
    %p192 = scmp.le.s32.totalorder 1, %s9
    %p193 = scmp.lt.s32.totalorder %s9, 3
    %p194 = pnand %p192, %p193
    %p195 = pneg %p194
    // Predicated region
    $region29: #{modulated_cross_attention.8} parent=5 // pred_check
      _
    $region30: #{modulated_cross_attention.8} parent=5 // pred_check_branch
      %197 = sbr.rel (%p194) target = $region32
    $region31: #{modulated_cross_attention.8} parent=5 // pred_region
      %s198 = ssub.s32 %s9, 1
      %s199 = smul.u32 2, %s20
      %p200 = scmp.lt.s32.totalorder %s19, 1
      %s201 = scalar_select %p200, %s19, 1
      %p202 = scmp.lt.s32.totalorder %s199, 1
      %s203 = scalar_select %p202, %s199, 1
      %s204 = smul.addr %s201, 2
      %s205 = sadd.s32 %s203, %s204
      %s206 = smul.addr %s205, 4
      %s207 = scalar_lea.vmem %s0, %s206
      %p208 = pneg %p56
      %p209 = pneg %p53
      %p210 = scmp.lt.s32.totalorder %s19, 1
      %s211 = scalar_select %p210, %s19, 1
      %p212 = scmp.lt.s32.totalorder %s21, 0
      %s213 = scalar_select %p212, %s21, 0
      %s214 = sadd.s32 %s213, %s211
      %s215 = smul.addr %s214, 4
      %s216 = scalar_lea.vmem %s1, %s215
      %p217 = pneg %p84
      %p218 = pneg %p81
      %p219 = scmp.lt.s32.totalorder %s19, 1
      %s220 = scalar_select %p219, %s19, 1
      %p221 = scmp.lt.s32.totalorder %s21, 0
      %s222 = scalar_select %p221, %s21, 0
      %s223 = sadd.s32 %s222, %s220
      %s224 = smul.addr %s223, 4
      %s225 = scalar_lea.vmem %s2, %s224
      %p226 = pneg %p112
      %p227 = pneg %p109
      %p228 = pneg %p140
      %p229 = pneg %p137
      %s230 = smul.u32 2, %s20
      %p231 = scmp.lt.s32.totalorder %s19, 1
      %s232 = scalar_select %p231, %s19, 1
      %p233 = scmp.lt.s32.totalorder %s230, 1
      %s234 = scalar_select %p233, %s230, 1
      %s235 = smul.addr %s232, 2
      %s236 = sadd.s32 %s234, %s235
      %s237 = smul.addr %s236, 4
      %s238 = scalar_lea.vmem %s3, %s237
      %s239 = smul.u32 2, %s20
      %p240 = scmp.lt.s32.totalorder %s19, 1
      %s241 = scalar_select %p240, %s19, 1
      %p242 = scmp.lt.s32.totalorder %s239, 1
      %s243 = scalar_select %p242, %s239, 1
      %s244 = smul.addr %s241, 2
      %s245 = sadd.s32 %s243, %s244
      %s246 = smul.addr %s245, 4
      %s247 = scalar_lea.vmem %s0, %s246
      %s248 = smul.u32 2, %s20
      %p249 = scmp.lt.s32.totalorder %s19, 1
      %s250 = scalar_select %p249, %s19, 1
      %p251 = scmp.lt.s32.totalorder %s21, 0
      %s252 = scalar_select %p251, %s21, 0
      %s253 = sadd.s32 %s252, %s250
      %s254 = smul.addr %s253, 4
      %s255 = scalar_lea.vmem %s1, %s254
      %p256 = scmp.lt.s32.totalorder %s19, 1
      %s257 = scalar_select %p256, %s19, 1
      %p258 = scmp.lt.s32.totalorder %s21, 0
      %s259 = scalar_select %p258, %s21, 0
      %s260 = sadd.s32 %s259, %s257
      %s261 = smul.addr %s260, 4
      %s262 = scalar_lea.vmem %s2, %s261
      %s263 = smul.u32 2, %s20
      %p264 = scmp.lt.s32.totalorder %s19, 1
      %s265 = scalar_select %p264, %s19, 1
      %p266 = scmp.lt.s32.totalorder %s263, 1
      %s267 = scalar_select %p266, %s263, 1
      %s268 = smul.addr %s265, 2
      %s269 = sadd.s32 %s267, %s268
      %s270 = smul.addr %s269, 4
      %s271 = scalar_lea.vmem %s3, %s270
      %s272 = smul.u32 2, %s20
      %p274 = scmp.eq.s32.totalorder %s21, 0
      // Predicated region
      $region33: #{modulated_cross_attention.8} parent=31 // pred_check
        %p275 = pneg %p274
      $region34: #{modulated_cross_attention.8} parent=31 // pred_check_branch
        %277 = sbr.rel (%p275) target = $region36
      $region35: #{modulated_cross_attention.8} parent=31 // pred_region
        %vm278 = vcmask 31744
        %279 = vst.msk [vmem:[#allocation2] sm:$0xff] %vm278, -inf
        %280 = vst.msk [vmem:[#allocation2 + $0x8] sm:$0xff] %vm278, -inf
        %281 = vst.msk [vmem:[#allocation3] sm:$0xff] %vm278, 0.0
        %282 = vst.msk [vmem:[#allocation3 + $0x8] sm:$0xff] %vm278, 0.0
        %vm283 = vcmask 261120
        %284 = vst.msk [vmem:[#allocation4] sm:$0xff] %vm283, 0.0
        %285 = vst.msk [vmem:[#allocation4 + $0x8] sm:$0xff] %vm283, 0.0
      $region36: #{modulated_cross_attention.8} parent=31 // pred_fallthru
        _
      %v286 = vld [vmem:[%s247] sm:$0xf]
      %v287 = vld [vmem:[%s247 + $0x4] sm:$0xf]
      %v288 = vld [vmem:[%s255] sm:$0xf]
      %v289 = vld [vmem:[%s262] sm:$0xf]
      %v292 = vunpack.c.l.b16 %v286
      %v293 = vunpack.c.l.b16 %v287
      %v294 = vpack.c.b16 %v293, %v292
      %vm295 = vcmask 64512
      %v297 = vsel %vm295, %v294, 0
      %v300 = vsel %vm295, %v288, 0
      %302 = vmatprep.subr.bf16.mxu0 0
      %303 = vmatpush1.bf16.xpose.msra.mxu0 %v300
      %304 = vmatprep.subr.bf16.mxu0 0
      %305 = vmatpush1.bf16.xpose.msra.mxu0 0
      %306 = vmatprep.subr.bf16.mxu0 0
      %307 = vmatpush1.bf16.xpose.msra.mxu0 0
      %308 = vmatprep.subr.bf16.mxu0 0
      %309 = vmatpush1.bf16.xpose.msra.mxu0 0
      %310 = vmatprep.subr.bf16.mxu0 0
      %311 = vmatpush1.bf16.xpose.msra.mxu0 0
      %312 = vmatprep.subr.bf16.mxu0 0
      %313 = vmatpush1.bf16.xpose.msra.mxu0 0
      %314 = vmatprep.subr.bf16.mxu0 0
      %315 = vmatpush1.bf16.xpose.msra.mxu0 0
      %316 = vmatprep.subr.bf16.mxu0 0
      %317 = vmatpush1.bf16.xpose.msra.mxu0 0
      %318 = vmatprep.subr.bf16.mxu0 0
      %319 = vmatpush1.bf16.xpose.msra.mxu0 0
      %320 = vmatprep.subr.bf16.mxu0 0
      %321 = vmatpush1.bf16.xpose.msra.mxu0 0
      %322 = vmatprep.subr.bf16.mxu0 0
      %323 = vmatpush1.bf16.xpose.msra.mxu0 0
      %324 = vmatprep.subr.bf16.mxu0 0
      %325 = vmatpush1.bf16.xpose.msra.mxu0 0
      %326 = vmatprep.subr.bf16.mxu0 0
      %327 = vmatpush1.bf16.xpose.msra.mxu0 0
      %328 = vmatprep.subr.bf16.mxu0 0
      %329 = vmatpush1.bf16.xpose.msra.mxu0 0
      %330 = vmatprep.subr.bf16.mxu0 0
      %331 = vmatpush1.bf16.xpose.msra.mxu0 0
      %332 = vmatprep.subr.bf16.mxu0 0
      %333 = vmatpush1.bf16.xpose.msra.mxu0 0
      %334 = vmatprep.mubr.bf16.mxu0 0
      %335 = vmatmul.mubr.bf16.gmra.mrb[0].mxu0 %v297
      %v336 = vpop.f32.mrb[0].mxu0
      %v337 = vadd.f32 0.0, %v336
      %v338 = vpop.f32.mrb[0].mxu0
      %v339 = vpop.f32.mrb[0].mxu0
      %v340 = vadd.f32 0.0, %v339
      %v341 = vpop.f32.mrb[0].mxu0
      %342 = vdwg.mxu0
      %v343 = vmul.f32 %v337, 0.35355338
      %v344 = vmul.f32 %v340, 0.35355338
      %v345 = vld [vmem:[#allocation2] sm:$0xff]
      %v346 = vld [vmem:[#allocation2 + $0x8] sm:$0xff]
      %v347 = vsel %vm295, %v343, -inf
      %348 = vmax.xlane.f32.xlu0 %v347
      %v349 = vpop.xlane.xlu0 %348
      %v350 = vsel %vm295, %v344, -inf
      %351 = vmax.xlane.f32.xlu0 %v350
      %v352 = vpop.xlane.xlu0 %351
      %v353 = vmax.f32 %v345, %v349
      %v354 = vmax.f32 %v346, %v352
      %v355 = vsub.f32 %v345, %v353
      %v356 = vsub.f32 %v346, %v354
      %v357 = vmul.f32 %v355, 1.442695
      %v358 = vpow.pop %v357
      %v359 = vmul.f32 %v356, 1.442695
      %v360 = vpow.pop %v359
      %362 = vset.pattern.permute.xlu0 0
      %363 = vperm.xlu0 %362, %v353
      %v364 = vpop.permute.xlu0 %363
      %367 = vset.pattern.permute.xlu0 0
      %368 = vperm.xlu0 %367, %v354
      %v369 = vpop.permute.xlu0 %368
      %v371 = vsub.f32 %v343, %v364
      %v372 = vsub.f32 %v344, %v369
      %v373 = vmul.f32 %v371, 1.442695
      %v374 = vpow.pop %v373
      %v375 = vmul.f32 %v372, 1.442695
      %v376 = vpow.pop %v375
      %v377 = vld [vmem:[#allocation3] sm:$0xff]
      %v378 = vld [vmem:[#allocation3 + $0x8] sm:$0xff]
      %v379 = vmul.f32 %v358, %v377
      %v380 = vmul.f32 %v360, %v378
      %v381 = vsel %vm295, %v374, 0.0
      %382 = vadd.xlane.f32.xlu0 %v381
      %v383 = vpop.xlane.xlu0 %382
      %v384 = vsel %vm295, %v376, 0.0
      %385 = vadd.xlane.f32.xlu0 %v384
      %v386 = vpop.xlane.xlu0 %385
      %v387 = vadd.f32 %v379, %v383
      %v388 = vadd.f32 %v380, %v386
      %vm389 = vcmask 7168
      %390 = vst.msk [vmem:[#allocation3] sm:$0xff] %vm389, %v387
      %391 = vst.msk [vmem:[#allocation3 + $0x8] sm:$0xff] %vm389, %v388
      %v392 = vld [vmem:[#allocation4] sm:$0xff]
      %v393 = vld [vmem:[#allocation4 + $0x8] sm:$0xff]
      %395 = vset.pattern.permute.xlu0 0
      %396 = vperm.xlu0 %395, %v358
      %v397 = vpop.permute.xlu0 %396
      %400 = vset.pattern.permute.xlu0 0
      %401 = vperm.xlu0 %400, %v360
      %v402 = vpop.permute.xlu0 %401
      %v404 = vmul.f32 %v397, %v392
      %v405 = vmul.f32 %v402, %v393
      %v406 = vpack.c.bf16 %v376, %v374
      %v408 = vsel %vm295, %v406, 0
      %vm410 = vcmask 1043456
      %v412 = vsel %vm410, %v289, 0
      %414 = vmatprep.subr.bf16.mxu0 0
      %415 = vmatpush1.bf16.msra.mxu0 %v412
      %416 = vmatprep.subr.bf16.mxu0 0
      %417 = vmatpush1.bf16.msra.mxu0 0
      %418 = vmatprep.subr.bf16.mxu0 0
      %419 = vmatpush1.bf16.msra.mxu0 0
      %420 = vmatprep.subr.bf16.mxu0 0
      %421 = vmatpush1.bf16.msra.mxu0 0
      %422 = vmatprep.subr.bf16.mxu0 0
      %423 = vmatpush1.bf16.msra.mxu0 0
      %424 = vmatprep.subr.bf16.mxu0 0
      %425 = vmatpush1.bf16.msra.mxu0 0
      %426 = vmatprep.subr.bf16.mxu0 0
      %427 = vmatpush1.bf16.msra.mxu0 0
      %428 = vmatprep.subr.bf16.mxu0 0
      %429 = vmatpush1.bf16.msra.mxu0 0
      %430 = vmatprep.subr.bf16.mxu0 0
      %431 = vmatpush1.bf16.msra.mxu0 0
      %432 = vmatprep.subr.bf16.mxu0 0
      %433 = vmatpush1.bf16.msra.mxu0 0
      %434 = vmatprep.subr.bf16.mxu0 0
      %435 = vmatpush1.bf16.msra.mxu0 0
      %436 = vmatprep.subr.bf16.mxu0 0
      %437 = vmatpush1.bf16.msra.mxu0 0
      %438 = vmatprep.subr.bf16.mxu0 0
      %439 = vmatpush1.bf16.msra.mxu0 0
      %440 = vmatprep.subr.bf16.mxu0 0
      %441 = vmatpush1.bf16.msra.mxu0 0
      %442 = vmatprep.subr.bf16.mxu0 0
      %443 = vmatpush1.bf16.msra.mxu0 0
      %444 = vmatprep.subr.bf16.mxu0 0
      %445 = vmatpush1.bf16.msra.mxu0 0
      %446 = vmatprep.mubr.bf16.mxu0 0
      %447 = vmatmul.mubr.bf16.gmra.mrb[0].mxu0 %v408
      %v448 = vpop.f32.mrb[0].mxu0
      %v449 = vadd.f32 0.0, %v448
      %v450 = vpop.f32.mrb[0].mxu0
      %v451 = vpop.f32.mrb[0].mxu0
      %v452 = vadd.f32 0.0, %v451
      %v453 = vpop.f32.mrb[0].mxu0
      %454 = vdwg.mxu0
      %v455 = vadd.f32 %v404, %v449
      %v456 = vadd.f32 %v405, %v452
      %457 = vst.msk [vmem:[#allocation4] sm:$0xff] %vm295, %v455
      %458 = vst.msk [vmem:[#allocation4 + $0x8] sm:$0xff] %vm295, %v456
      %459 = vst.msk [vmem:[#allocation2] sm:$0xff] %vm389, %v353
      %460 = vst.msk [vmem:[#allocation2 + $0x8] sm:$0xff] %vm389, %v354
      %461 = vrot.lane.b32.xlu0 %v294, 120
      %v462 = vpop.permute.xlu0 %461
      %v464 = vunpack.c.l.b16 %v288
      %v465 = vpack.c.b16 %v464, %v464
      %466 = vrot.lane.b32.xlu0 %v465, 120
      %v467 = vpop.permute.xlu0 %466
      %v469 = vsel %vm295, %v462, 0
      %v472 = vsel %vm295, %v467, 0
      %474 = vmatprep.subr.bf16.mxu0 0
      %475 = vmatpush1.bf16.xpose.msra.mxu0 %v472
      %476 = vmatprep.subr.bf16.mxu0 0
      %477 = vmatpush1.bf16.xpose.msra.mxu0 0
      %478 = vmatprep.subr.bf16.mxu0 0
      %479 = vmatpush1.bf16.xpose.msra.mxu0 0
      %480 = vmatprep.subr.bf16.mxu0 0
      %481 = vmatpush1.bf16.xpose.msra.mxu0 0
      %482 = vmatprep.subr.bf16.mxu0 0
      %483 = vmatpush1.bf16.xpose.msra.mxu0 0
      %484 = vmatprep.subr.bf16.mxu0 0
      %485 = vmatpush1.bf16.xpose.msra.mxu0 0
      %486 = vmatprep.subr.bf16.mxu0 0
      %487 = vmatpush1.bf16.xpose.msra.mxu0 0
      %488 = vmatprep.subr.bf16.mxu0 0
      %489 = vmatpush1.bf16.xpose.msra.mxu0 0
      %490 = vmatprep.subr.bf16.mxu0 0
      %491 = vmatpush1.bf16.xpose.msra.mxu0 0
      %492 = vmatprep.subr.bf16.mxu0 0
      %493 = vmatpush1.bf16.xpose.msra.mxu0 0
      %494 = vmatprep.subr.bf16.mxu0 0
      %495 = vmatpush1.bf16.xpose.msra.mxu0 0
      %496 = vmatprep.subr.bf16.mxu0 0
      %497 = vmatpush1.bf16.xpose.msra.mxu0 0
      %498 = vmatprep.subr.bf16.mxu0 0
      %499 = vmatpush1.bf16.xpose.msra.mxu0 0
      %500 = vmatprep.subr.bf16.mxu0 0
      %501 = vmatpush1.bf16.xpose.msra.mxu0 0
      %502 = vmatprep.subr.bf16.mxu0 0
      %503 = vmatpush1.bf16.xpose.msra.mxu0 0
      %504 = vmatprep.subr.bf16.mxu0 0
      %505 = vmatpush1.bf16.xpose.msra.mxu0 0
      %506 = vmatprep.mubr.bf16.mxu0 0
      %507 = vmatmul.mubr.bf16.gmra.mrb[0].mxu0 %v469
      %v508 = vpop.f32.mrb[0].mxu0
      %v509 = vadd.f32 0.0, %v508
      %v510 = vpop.f32.mrb[0].mxu0
      %v511 = vpop.f32.mrb[0].mxu0
      %v512 = vadd.f32 0.0, %v511
      %v513 = vpop.f32.mrb[0].mxu0
      %514 = vdwg.mxu0
      %v515 = vmul.f32 %v509, 0.35355338
      %v516 = vmul.f32 %v512, 0.35355338
      %v517 = vld [vmem:[#allocation2] sm:$0xff]
      %v518 = vld [vmem:[#allocation2 + $0x8] sm:$0xff]
      %v519 = vsel %vm295, %v515, -inf
      %520 = vmax.xlane.f32.xlu0 %v519
      %v521 = vpop.xlane.xlu0 %520
      %v522 = vsel %vm295, %v516, -inf
      %523 = vmax.xlane.f32.xlu0 %v522
      %v524 = vpop.xlane.xlu0 %523
      %v525 = vmax.f32 %v517, %v521
      %v526 = vmax.f32 %v518, %v524
      %v527 = vsub.f32 %v517, %v525
      %v528 = vsub.f32 %v518, %v526
      %v529 = vmul.f32 %v527, 1.442695
      %v530 = vpow.pop %v529
      %v531 = vmul.f32 %v528, 1.442695
      %v532 = vpow.pop %v531
      %534 = vset.pattern.permute.xlu0 1
      %535 = vperm.xlu0 %534, %v525
      %v536 = vpop.permute.xlu0 %535
      %539 = vset.pattern.permute.xlu0 1
      %540 = vperm.xlu0 %539, %v526
      %v541 = vpop.permute.xlu0 %540
      %v543 = vsub.f32 %v515, %v536
      %v544 = vsub.f32 %v516, %v541
      %v545 = vmul.f32 %v543, 1.442695
      %v546 = vpow.pop %v545
      %v547 = vmul.f32 %v544, 1.442695
      %v548 = vpow.pop %v547
      %v549 = vld [vmem:[#allocation3] sm:$0xff]
      %v550 = vld [vmem:[#allocation3 + $0x8] sm:$0xff]
      %v551 = vmul.f32 %v530, %v549
      %v552 = vmul.f32 %v532, %v550
      %v553 = vsel %vm295, %v546, 0.0
      %554 = vadd.xlane.f32.xlu0 %v553
      %v555 = vpop.xlane.xlu0 %554
      %v556 = vsel %vm295, %v548, 0.0
      %557 = vadd.xlane.f32.xlu0 %v556
      %v558 = vpop.xlane.xlu0 %557
      %v559 = vadd.f32 %v551, %v555
      %v560 = vadd.f32 %v552, %v558
      %vm561 = vcmask 15368
      %562 = vst.msk [vmem:[#allocation3] sm:$0xff] %vm561, %v559
      %563 = vst.msk [vmem:[#allocation3 + $0x8] sm:$0xff] %vm561, %v560
      %v564 = vld [vmem:[#allocation4] sm:$0xff]
      %v565 = vld [vmem:[#allocation4 + $0x8] sm:$0xff]
      %567 = vset.pattern.permute.xlu0 1
      %568 = vperm.xlu0 %567, %v530
      %v569 = vpop.permute.xlu0 %568
      %572 = vset.pattern.permute.xlu0 1
      %573 = vperm.xlu0 %572, %v532
      %v574 = vpop.permute.xlu0 %573
      %v576 = vmul.f32 %v569, %v564
      %v577 = vmul.f32 %v574, %v565
      %v578 = vpack.c.bf16 %v548, %v546
      %v580 = vunpack.c.l.b16 %v289
      %v581 = vpack.c.b16 %v580, %v580
      %582 = vrot.lane.b32.xlu0 %v581, 120
      %v583 = vpop.permute.xlu0 %582
      %v585 = vsel %vm295, %v578, 0
      %v588 = vsel %vm410, %v583, 0
      %590 = vmatprep.subr.bf16.mxu0 0
      %591 = vmatpush1.bf16.msra.mxu0 %v588
      %592 = vmatprep.subr.bf16.mxu0 0
      %593 = vmatpush1.bf16.msra.mxu0 0
      %594 = vmatprep.subr.bf16.mxu0 0
      %595 = vmatpush1.bf16.msra.mxu0 0
      %596 = vmatprep.subr.bf16.mxu0 0
      %597 = vmatpush1.bf16.msra.mxu0 0
      %598 = vmatprep.subr.bf16.mxu0 0
      %599 = vmatpush1.bf16.msra.mxu0 0
      %600 = vmatprep.subr.bf16.mxu0 0
      %601 = vmatpush1.bf16.msra.mxu0 0
      %602 = vmatprep.subr.bf16.mxu0 0
      %603 = vmatpush1.bf16.msra.mxu0 0
      %604 = vmatprep.subr.bf16.mxu0 0
      %605 = vmatpush1.bf16.msra.mxu0 0
      %606 = vmatprep.subr.bf16.mxu0 0
      %607 = vmatpush1.bf16.msra.mxu0 0
      %608 = vmatprep.subr.bf16.mxu0 0
      %609 = vmatpush1.bf16.msra.mxu0 0
      %610 = vmatprep.subr.bf16.mxu0 0
      %611 = vmatpush1.bf16.msra.mxu0 0
      %612 = vmatprep.subr.bf16.mxu0 0
      %613 = vmatpush1.bf16.msra.mxu0 0
      %614 = vmatprep.subr.bf16.mxu0 0
      %615 = vmatpush1.bf16.msra.mxu0 0
      %616 = vmatprep.subr.bf16.mxu0 0
      %617 = vmatpush1.bf16.msra.mxu0 0
      %618 = vmatprep.subr.bf16.mxu0 0
      %619 = vmatpush1.bf16.msra.mxu0 0
      %620 = vmatprep.subr.bf16.mxu0 0
      %621 = vmatpush1.bf16.msra.mxu0 0
      %622 = vmatprep.mubr.bf16.mxu0 0
      %623 = vmatmul.mubr.bf16.gmra.mrb[0].mxu0 %v585
      %v624 = vpop.f32.mrb[0].mxu0
      %v625 = vadd.f32 0.0, %v624
      %v626 = vpop.f32.mrb[0].mxu0
      %v627 = vpop.f32.mrb[0].mxu0
      %v628 = vadd.f32 0.0, %v627
      %v629 = vpop.f32.mrb[0].mxu0
      %630 = vdwg.mxu0
      %633 = vrot.lane.b32.xlu0 %v625, 8
      %v634 = vpop.permute.xlu0 %633
      %635 = vrot.lane.b32.xlu0 %v628, 8
      %v636 = vpop.permute.xlu0 %635
      %v639 = vadd.f32 %v576, %v634
      %v640 = vadd.f32 %v577, %v636
      %vm641 = vcmask 130112
      %642 = vst.msk [vmem:[#allocation4] sm:$0xff] %vm641, %v639
      %643 = vst.msk [vmem:[#allocation4 + $0x8] sm:$0xff] %vm641, %v640
      %644 = vst.msk [vmem:[#allocation2] sm:$0xff] %vm561, %v525
      %645 = vst.msk [vmem:[#allocation2 + $0x8] sm:$0xff] %vm561, %v526
      %646 = vrot.lane.b32.xlu0 %v294, 112
      %v647 = vpop.permute.xlu0 %646
      %648 = vrot.lane.b32.xlu0 %v465, 112
      %v649 = vpop.permute.xlu0 %648
      %v651 = vsel %vm295, %v647, 0
      %v654 = vsel %vm295, %v649, 0
      %656 = vmatprep.subr.bf16.mxu0 0
      %657 = vmatpush1.bf16.xpose.msra.mxu0 %v654
      %658 = vmatprep.subr.bf16.mxu0 0
      %659 = vmatpush1.bf16.xpose.msra.mxu0 0
      %660 = vmatprep.subr.bf16.mxu0 0
      %661 = vmatpush1.bf16.xpose.msra.mxu0 0
      %662 = vmatprep.subr.bf16.mxu0 0
      %663 = vmatpush1.bf16.xpose.msra.mxu0 0
      %664 = vmatprep.subr.bf16.mxu0 0
      %665 = vmatpush1.bf16.xpose.msra.mxu0 0
      %666 = vmatprep.subr.bf16.mxu0 0
      %667 = vmatpush1.bf16.xpose.msra.mxu0 0
      %668 = vmatprep.subr.bf16.mxu0 0
      %669 = vmatpush1.bf16.xpose.msra.mxu0 0
      %670 = vmatprep.subr.bf16.mxu0 0
      %671 = vmatpush1.bf16.xpose.msra.mxu0 0
      %672 = vmatprep.subr.bf16.mxu0 0
      %673 = vmatpush1.bf16.xpose.msra.mxu0 0
      %674 = vmatprep.subr.bf16.mxu0 0
      %675 = vmatpush1.bf16.xpose.msra.mxu0 0
      %676 = vmatprep.subr.bf16.mxu0 0
      %677 = vmatpush1.bf16.xpose.msra.mxu0 0
      %678 = vmatprep.subr.bf16.mxu0 0
      %679 = vmatpush1.bf16.xpose.msra.mxu0 0
      %680 = vmatprep.subr.bf16.mxu0 0
      %681 = vmatpush1.bf16.xpose.msra.mxu0 0
      %682 = vmatprep.subr.bf16.mxu0 0
      %683 = vmatpush1.bf16.xpose.msra.mxu0 0
      %684 = vmatprep.subr.bf16.mxu0 0
      %685 = vmatpush1.bf16.xpose.msra.mxu0 0
      %686 = vmatprep.subr.bf16.mxu0 0
      %687 = vmatpush1.bf16.xpose.msra.mxu0 0
      %688 = vmatprep.mubr.bf16.mxu0 0
      %689 = vmatmul.mubr.bf16.gmra.mrb[0].mxu0 %v651
      %v690 = vpop.f32.mrb[0].mxu0
      %v691 = vadd.f32 0.0, %v690
      %v692 = vpop.f32.mrb[0].mxu0
      %v693 = vpop.f32.mrb[0].mxu0
      %v694 = vadd.f32 0.0, %v693
      %v695 = vpop.f32.mrb[0].mxu0
      %696 = vdwg.mxu0
      %v697 = vmul.f32 %v691, 0.35355338
      %v698 = vmul.f32 %v694, 0.35355338
      %v699 = vld [vmem:[#allocation2] sm:$0xff]
      %v700 = vld [vmem:[#allocation2 + $0x8] sm:$0xff]
      %v701 = vsel %vm295, %v697, -inf
      %702 = vmax.xlane.f32.xlu0 %v701
      %v703 = vpop.xlane.xlu0 %702
      %v704 = vsel %vm295, %v698, -inf
      %705 = vmax.xlane.f32.xlu0 %v704
      %v706 = vpop.xlane.xlu0 %705
      %v707 = vmax.f32 %v699, %v703
      %v708 = vmax.f32 %v700, %v706
      %v709 = vsub.f32 %v699, %v707
      %v710 = vsub.f32 %v700, %v708
      %v711 = vmul.f32 %v709, 1.442695
      %v712 = vpow.pop %v711
      %v713 = vmul.f32 %v710, 1.442695
      %v714 = vpow.pop %v713
      %716 = vset.pattern.permute.xlu0 2
      %717 = vperm.xlu0 %716, %v707
      %v718 = vpop.permute.xlu0 %717
      %721 = vset.pattern.permute.xlu0 2
      %722 = vperm.xlu0 %721, %v708
      %v723 = vpop.permute.xlu0 %722
      %v725 = vsub.f32 %v697, %v718
      %v726 = vsub.f32 %v698, %v723
      %v727 = vmul.f32 %v725, 1.442695
      %v728 = vpow.pop %v727
      %v729 = vmul.f32 %v726, 1.442695
      %v730 = vpow.pop %v729
      %v731 = vld [vmem:[#allocation3] sm:$0xff]
      %v732 = vld [vmem:[#allocation3 + $0x8] sm:$0xff]
      %v733 = vmul.f32 %v712, %v731
      %v734 = vmul.f32 %v714, %v732
      %v735 = vsel %vm295, %v728, 0.0
      %736 = vadd.xlane.f32.xlu0 %v735
      %v737 = vpop.xlane.xlu0 %736
      %v738 = vsel %vm295, %v730, 0.0
      %739 = vadd.xlane.f32.xlu0 %v738
      %v740 = vpop.xlane.xlu0 %739
      %v741 = vadd.f32 %v733, %v737
      %v742 = vadd.f32 %v734, %v740
      %vm743 = vcmask 23568
      %744 = vst.msk [vmem:[#allocation3] sm:$0xff] %vm743, %v741
      %745 = vst.msk [vmem:[#allocation3 + $0x8] sm:$0xff] %vm743, %v742
      %v746 = vld [vmem:[#allocation4] sm:$0xff]
      %v747 = vld [vmem:[#allocation4 + $0x8] sm:$0xff]
      %749 = vset.pattern.permute.xlu0 2
      %750 = vperm.xlu0 %749, %v712
      %v751 = vpop.permute.xlu0 %750
      %754 = vset.pattern.permute.xlu0 2
      %755 = vperm.xlu0 %754, %v714
      %v756 = vpop.permute.xlu0 %755
      %v758 = vmul.f32 %v751, %v746
      %v759 = vmul.f32 %v756, %v747
      %v760 = vpack.c.bf16 %v730, %v728
      %761 = vrot.lane.b32.xlu0 %v581, 112
      %v762 = vpop.permute.xlu0 %761
      %v764 = vsel %vm295, %v760, 0
      %v767 = vsel %vm410, %v762, 0
      %769 = vmatprep.subr.bf16.mxu0 0
      %770 = vmatpush1.bf16.msra.mxu0 %v767
      %771 = vmatprep.subr.bf16.mxu0 0
      %772 = vmatpush1.bf16.msra.mxu0 0
      %773 = vmatprep.subr.bf16.mxu0 0
      %774 = vmatpush1.bf16.msra.mxu0 0
      %775 = vmatprep.subr.bf16.mxu0 0
      %776 = vmatpush1.bf16.msra.mxu0 0
      %777 = vmatprep.subr.bf16.mxu0 0
      %778 = vmatpush1.bf16.msra.mxu0 0
      %779 = vmatprep.subr.bf16.mxu0 0
      %780 = vmatpush1.bf16.msra.mxu0 0
      %781 = vmatprep.subr.bf16.mxu0 0
      %782 = vmatpush1.bf16.msra.mxu0 0
      %783 = vmatprep.subr.bf16.mxu0 0
      %784 = vmatpush1.bf16.msra.mxu0 0
      %785 = vmatprep.subr.bf16.mxu0 0
      %786 = vmatpush1.bf16.msra.mxu0 0
      %787 = vmatprep.subr.bf16.mxu0 0
      %788 = vmatpush1.bf16.msra.mxu0 0
      %789 = vmatprep.subr.bf16.mxu0 0
      %790 = vmatpush1.bf16.msra.mxu0 0
      %791 = vmatprep.subr.bf16.mxu0 0
      %792 = vmatpush1.bf16.msra.mxu0 0
      %793 = vmatprep.subr.bf16.mxu0 0
      %794 = vmatpush1.bf16.msra.mxu0 0
      %795 = vmatprep.subr.bf16.mxu0 0
      %796 = vmatpush1.bf16.msra.mxu0 0
      %797 = vmatprep.subr.bf16.mxu0 0
      %798 = vmatpush1.bf16.msra.mxu0 0
      %799 = vmatprep.subr.bf16.mxu0 0
      %800 = vmatpush1.bf16.msra.mxu0 0
      %801 = vmatprep.mubr.bf16.mxu0 0
      %802 = vmatmul.mubr.bf16.gmra.mrb[0].mxu0 %v764
      %v803 = vpop.f32.mrb[0].mxu0
      %v804 = vadd.f32 0.0, %v803
      %v805 = vpop.f32.mrb[0].mxu0
      %v806 = vpop.f32.mrb[0].mxu0
      %v807 = vadd.f32 0.0, %v806
      %v808 = vpop.f32.mrb[0].mxu0
      %809 = vdwg.mxu0
      %812 = vrot.lane.b32.xlu0 %v804, 16
      %v813 = vpop.permute.xlu0 %812
      %814 = vrot.lane.b32.xlu0 %v807, 16
      %v815 = vpop.permute.xlu0 %814
      %v818 = vadd.f32 %v758, %v813
      %v819 = vadd.f32 %v759, %v815
      %vm820 = vcmask 195712
      %821 = vst.msk [vmem:[#allocation4] sm:$0xff] %vm820, %v818
      %822 = vst.msk [vmem:[#allocation4 + $0x8] sm:$0xff] %vm820, %v819
      %823 = vst.msk [vmem:[#allocation2] sm:$0xff] %vm743, %v707
      %824 = vst.msk [vmem:[#allocation2 + $0x8] sm:$0xff] %vm743, %v708
      %825 = vrot.lane.b32.xlu0 %v294, 104
      %v826 = vpop.permute.xlu0 %825
      %827 = vrot.lane.b32.xlu0 %v465, 104
      %v828 = vpop.permute.xlu0 %827
      %v830 = vsel %vm295, %v826, 0
      %v833 = vsel %vm295, %v828, 0
      %835 = vmatprep.subr.bf16.mxu0 0
      %836 = vmatpush1.bf16.xpose.msra.mxu0 %v833
      %837 = vmatprep.subr.bf16.mxu0 0
      %838 = vmatpush1.bf16.xpose.msra.mxu0 0
      %839 = vmatprep.subr.bf16.mxu0 0
      %840 = vmatpush1.bf16.xpose.msra.mxu0 0
      %841 = vmatprep.subr.bf16.mxu0 0
      %842 = vmatpush1.bf16.xpose.msra.mxu0 0
      %843 = vmatprep.subr.bf16.mxu0 0
      %844 = vmatpush1.bf16.xpose.msra.mxu0 0
      %845 = vmatprep.subr.bf16.mxu0 0
      %846 = vmatpush1.bf16.xpose.msra.mxu0 0
      %847 = vmatprep.subr.bf16.mxu0 0
      %848 = vmatpush1.bf16.xpose.msra.mxu0 0
      %849 = vmatprep.subr.bf16.mxu0 0
      %850 = vmatpush1.bf16.xpose.msra.mxu0 0
      %851 = vmatprep.subr.bf16.mxu0 0
      %852 = vmatpush1.bf16.xpose.msra.mxu0 0
      %853 = vmatprep.subr.bf16.mxu0 0
      %854 = vmatpush1.bf16.xpose.msra.mxu0 0
      %855 = vmatprep.subr.bf16.mxu0 0
      %856 = vmatpush1.bf16.xpose.msra.mxu0 0
      %857 = vmatprep.subr.bf16.mxu0 0
      %858 = vmatpush1.bf16.xpose.msra.mxu0 0
      %859 = vmatprep.subr.bf16.mxu0 0
      %860 = vmatpush1.bf16.xpose.msra.mxu0 0
      %861 = vmatprep.subr.bf16.mxu0 0
      %862 = vmatpush1.bf16.xpose.msra.mxu0 0
      %863 = vmatprep.subr.bf16.mxu0 0
      %864 = vmatpush1.bf16.xpose.msra.mxu0 0
      %865 = vmatprep.subr.bf16.mxu0 0
      %866 = vmatpush1.bf16.xpose.msra.mxu0 0
      %867 = vmatprep.mubr.bf16.mxu0 0
      %868 = vmatmul.mubr.bf16.gmra.mrb[0].mxu0 %v830
      %v869 = vpop.f32.mrb[0].mxu0
      %v870 = vadd.f32 0.0, %v869
      %v871 = vpop.f32.mrb[0].mxu0
      %v872 = vpop.f32.mrb[0].mxu0
      %v873 = vadd.f32 0.0, %v872
      %v874 = vpop.f32.mrb[0].mxu0
      %875 = vdwg.mxu0
      %v876 = vmul.f32 %v870, 0.35355338
      %v877 = vmul.f32 %v873, 0.35355338
      %v878 = vld [vmem:[#allocation2] sm:$0xff]
      %v879 = vld [vmem:[#allocation2 + $0x8] sm:$0xff]
      %v880 = vsel %vm295, %v876, -inf
      %881 = vmax.xlane.f32.xlu0 %v880
      %v882 = vpop.xlane.xlu0 %881
      %v883 = vsel %vm295, %v877, -inf
      %884 = vmax.xlane.f32.xlu0 %v883
      %v885 = vpop.xlane.xlu0 %884
      %v886 = vmax.f32 %v878, %v882
      %v887 = vmax.f32 %v879, %v885
      %v888 = vsub.f32 %v878, %v886
      %v889 = vsub.f32 %v879, %v887
      %v890 = vmul.f32 %v888, 1.442695
      %v891 = vpow.pop %v890
      %v892 = vmul.f32 %v889, 1.442695
      %v893 = vpow.pop %v892
      %895 = vset.pattern.permute.xlu0 3
      %896 = vperm.xlu0 %895, %v886
      %v897 = vpop.permute.xlu0 %896
      %900 = vset.pattern.permute.xlu0 3
      %901 = vperm.xlu0 %900, %v887
      %v902 = vpop.permute.xlu0 %901
      %v904 = vsub.f32 %v876, %v897
      %v905 = vsub.f32 %v877, %v902
      %v906 = vmul.f32 %v904, 1.442695
      %v907 = vpow.pop %v906
      %v908 = vmul.f32 %v905, 1.442695
      %v909 = vpow.pop %v908
      %v910 = vld [vmem:[#allocation3] sm:$0xff]
      %v911 = vld [vmem:[#allocation3 + $0x8] sm:$0xff]
      %v912 = vmul.f32 %v891, %v910
      %v913 = vmul.f32 %v893, %v911
      %v914 = vsel %vm295, %v907, 0.0
      %915 = vadd.xlane.f32.xlu0 %v914
      %v916 = vpop.xlane.xlu0 %915
      %v917 = vsel %vm295, %v909, 0.0
      %918 = vadd.xlane.f32.xlu0 %v917
      %v919 = vpop.xlane.xlu0 %918
      %v920 = vadd.f32 %v912, %v916
      %v921 = vadd.f32 %v913, %v919
      %vm922 = vcmask 31768
      %923 = vst.msk [vmem:[#allocation3] sm:$0xff] %vm922, %v920
      %924 = vst.msk [vmem:[#allocation3 + $0x8] sm:$0xff] %vm922, %v921
      %v925 = vld [vmem:[#allocation4] sm:$0xff]
      %v926 = vld [vmem:[#allocation4 + $0x8] sm:$0xff]
      %928 = vset.pattern.permute.xlu0 3
      %929 = vperm.xlu0 %928, %v891
      %v930 = vpop.permute.xlu0 %929
      %933 = vset.pattern.permute.xlu0 3
      %934 = vperm.xlu0 %933, %v893
      %v935 = vpop.permute.xlu0 %934
      %v937 = vmul.f32 %v930, %v925
      %v938 = vmul.f32 %v935, %v926
      %v939 = vpack.c.bf16 %v909, %v907
      %940 = vrot.lane.b32.xlu0 %v581, 104
      %v941 = vpop.permute.xlu0 %940
      %v943 = vsel %vm295, %v939, 0
      %v946 = vsel %vm410, %v941, 0
      %948 = vmatprep.subr.bf16.mxu0 0
      %949 = vmatpush1.bf16.msra.mxu0 %v946
      %950 = vmatprep.subr.bf16.mxu0 0
      %951 = vmatpush1.bf16.msra.mxu0 0
      %952 = vmatprep.subr.bf16.mxu0 0
      %953 = vmatpush1.bf16.msra.mxu0 0
      %954 = vmatprep.subr.bf16.mxu0 0
      %955 = vmatpush1.bf16.msra.mxu0 0
      %956 = vmatprep.subr.bf16.mxu0 0
      %957 = vmatpush1.bf16.msra.mxu0 0
      %958 = vmatprep.subr.bf16.mxu0 0
      %959 = vmatpush1.bf16.msra.mxu0 0
      %960 = vmatprep.subr.bf16.mxu0 0
      %961 = vmatpush1.bf16.msra.mxu0 0
      %962 = vmatprep.subr.bf16.mxu0 0
      %963 = vmatpush1.bf16.msra.mxu0 0
      %964 = vmatprep.subr.bf16.mxu0 0
      %965 = vmatpush1.bf16.msra.mxu0 0
      %966 = vmatprep.subr.bf16.mxu0 0
      %967 = vmatpush1.bf16.msra.mxu0 0
      %968 = vmatprep.subr.bf16.mxu0 0
      %969 = vmatpush1.bf16.msra.mxu0 0
      %970 = vmatprep.subr.bf16.mxu0 0
      %971 = vmatpush1.bf16.msra.mxu0 0
      %972 = vmatprep.subr.bf16.mxu0 0
      %973 = vmatpush1.bf16.msra.mxu0 0
      %974 = vmatprep.subr.bf16.mxu0 0
      %975 = vmatpush1.bf16.msra.mxu0 0
      %976 = vmatprep.subr.bf16.mxu0 0
      %977 = vmatpush1.bf16.msra.mxu0 0
      %978 = vmatprep.subr.bf16.mxu0 0
      %979 = vmatpush1.bf16.msra.mxu0 0
      %980 = vmatprep.mubr.bf16.mxu0 0
      %981 = vmatmul.mubr.bf16.gmra.mrb[0].mxu0 %v943
      %v982 = vpop.f32.mrb[0].mxu0
      %v983 = vadd.f32 0.0, %v982
      %v984 = vpop.f32.mrb[0].mxu0
      %v985 = vpop.f32.mrb[0].mxu0
      %v986 = vadd.f32 0.0, %v985
      %v987 = vpop.f32.mrb[0].mxu0
      %988 = vdwg.mxu0
      %991 = vrot.lane.b32.xlu0 %v983, 24
      %v992 = vpop.permute.xlu0 %991
      %993 = vrot.lane.b32.xlu0 %v986, 24
      %v994 = vpop.permute.xlu0 %993
      %v997 = vadd.f32 %v937, %v992
      %v998 = vadd.f32 %v938, %v994
      %vm999 = vcmask 261312
      %1000 = vst.msk [vmem:[#allocation4] sm:$0xff] %vm999, %v997
      %1001 = vst.msk [vmem:[#allocation4 + $0x8] sm:$0xff] %vm999, %v998
      %1002 = vst.msk [vmem:[#allocation2] sm:$0xff] %vm922, %v886
      %1003 = vst.msk [vmem:[#allocation2 + $0x8] sm:$0xff] %vm922, %v887
      // Predicated region
      $region37: #{modulated_cross_attention.8} parent=31 // pred_check
        %p1004 = pneg %p274
      $region38: #{modulated_cross_attention.8} parent=31 // pred_check_branch
        %1006 = sbr.rel (%p1004) target = $region40
      $region39: #{modulated_cross_attention.8} parent=31 // pred_region
        %v1007 = vld [vmem:[#allocation3] sm:$0xff]
        %v1008 = vld [vmem:[#allocation3 + $0x8] sm:$0xff]
        %v1009 = vrcp.pop %v1007
        %v1010 = vrcp.pop %v1008
        %v1011 = vld [vmem:[#allocation4] sm:$0xff]
        %v1012 = vld [vmem:[#allocation4 + $0x8] sm:$0xff]
        %1014 = vset.pattern.permute.xlu0 0
        %1015 = vperm.xlu0 %1014, %v1009
        %v1016 = vpop.permute.xlu0 %1015
        %1019 = vset.pattern.permute.xlu0 0
        %1020 = vperm.xlu0 %1019, %v1010
        %v1021 = vpop.permute.xlu0 %1020
        %v1023 = vmul.f32 %v1011, %v1016
        %v1024 = vmul.f32 %v1012, %v1021
        %1025 = vset.pattern.permute.xlu0 1
        %1026 = vperm.xlu0 %1025, %v1009
        %v1027 = vpop.permute.xlu0 %1026
        %1029 = vset.pattern.permute.xlu0 1
        %1030 = vperm.xlu0 %1029, %v1010
        %v1031 = vpop.permute.xlu0 %1030
        %v1033 = vmul.f32 %v1011, %v1027
        %v1034 = vmul.f32 %v1012, %v1031
        %1035 = vset.pattern.permute.xlu0 2
        %1036 = vperm.xlu0 %1035, %v1009
        %v1037 = vpop.permute.xlu0 %1036
        %1039 = vset.pattern.permute.xlu0 2
        %1040 = vperm.xlu0 %1039, %v1010
        %v1041 = vpop.permute.xlu0 %1040
        %v1043 = vmul.f32 %v1011, %v1037
        %v1044 = vmul.f32 %v1012, %v1041
        %1045 = vset.pattern.permute.xlu0 3
        %1046 = vperm.xlu0 %1045, %v1009
        %v1047 = vpop.permute.xlu0 %1046
        %1049 = vset.pattern.permute.xlu0 3
        %1050 = vperm.xlu0 %1049, %v1010
        %v1051 = vpop.permute.xlu0 %1050
        %v1053 = vmul.f32 %v1011, %v1047
        %v1054 = vmul.f32 %v1012, %v1051
        %v1055 = vsel %vm295, %v1023, %v1033
        %v1056 = vsel %vm295, %v1024, %v1034
        %vm1057 = vcmask 130048
        %v1058 = vsel %vm1057, %v1055, %v1043
        %v1059 = vsel %vm1057, %v1056, %v1044
        %vm1060 = vcmask 195584
        %v1061 = vsel %vm1060, %v1058, %v1053
        %v1062 = vsel %vm1060, %v1059, %v1054
        %v1063 = vpack.c.bf16 %v1062, %v1061
        %v1065 = vunpack.c.l.b16 %v1063
        %v1066 = vunpack.c.h.b16 %v1063
        %v1067 = vpack.c.b16 %v1065, %v1065
        %v1068 = vpack.c.b16 %v1066, %v1066
        %vm1071 = vcmask 257024
        %1072 = vst.msk [vmem:[%s271] sm:$0xf] %vm1071, %v1067
        %1073 = vst.msk [vmem:[%s271 + $0x4] sm:$0xf] %vm1071, %v1068
      $region40: #{modulated_cross_attention.8} parent=31 // pred_fallthru
        _
      %s1074 = smul.u32 2, %s20
      %p1075 = scmp.lt.s32.totalorder %s19, 1
      %s1076 = scalar_select %p1075, %s19, 1
      %p1077 = scmp.lt.s32.totalorder %s1074, 1
      %s1078 = scalar_select %p1077, %s1074, 1
      %s1079 = smul.addr %s1076, 2
      %s1080 = sadd.s32 %s1078, %s1079
      %s1081 = smul.addr %s1080, 4
      %s1082 = scalar_lea.vmem %s3, %s1081
      // Predicated region
      $region41: #{modulated_cross_attention.8} parent=31 // pred_check
        %p1083 = pneg %p137
      $region42: #{modulated_cross_attention.8} parent=31 // pred_check_branch
        %1085 = sbr.rel (%p1083) target = $region44
      $region43: #{modulated_cross_attention.8} parent=31 // pred_region
        %s1086 = smul.u32 2, %s20
      $region44: #{modulated_cross_attention.8} parent=31 // pred_fallthru
        _
    $region32: #{modulated_cross_attention.8} parent=5 // pred_fallthru
      _
    %p1087 = scmp.le.s32.totalorder 2, %s9
    // Predicated region
    $region45: #{modulated_cross_attention.8} parent=5 // pred_check
      %p1088 = pneg %p1087
    $region46: #{modulated_cross_attention.8} parent=5 // pred_check_branch
      %1090 = sbr.rel (%p1088) target = $region48
    $region47: #{modulated_cross_attention.8} parent=5 // pred_region
      %s1091 = ssub.s32 %s9, 2
      // Predicated region
      $region49: #{modulated_cross_attention.8} parent=47 // pred_check
        %p1092 = pneg %p143
      $region50: #{modulated_cross_attention.8} parent=47 // pred_check_branch
        %1094 = sbr.rel (%p1092) target = $region52
      $region51: #{modulated_cross_attention.8} parent=47 // pred_region
        %s1095 = smul.u32 2, %s23
        %p1096 = scmp.lt.s32.totalorder %s22, 1
        %s1097 = scalar_select %p1096, %s22, 1
        %p1098 = scmp.lt.s32.totalorder %s1095, 1
        %s1099 = scalar_select %p1098, %s1095, 1
        %s1100 = smul.addr %s1097, 2
        %s1101 = sadd.s32 %s1099, %s1100
        %s1102 = smul.addr %s1101, 4
        %s1103 = scalar_lea.vmem %s3, %s1102
      $region52: #{modulated_cross_attention.8} parent=47 // pred_fallthru
        _
    $region48: #{modulated_cross_attention.8} parent=5 // pred_fallthru
      _
  $region6: #{modulated_cross_attention.8} parent=0 // loop_footer
    %s13 = sadd.s32 1, %s9
  $region7: #{modulated_cross_attention.8} parent=0 // loop_footer_branch
    %8 = sbr.rel target = $region3
  $region8: #{modulated_cross_attention.8} parent=0 // loop_exit
    _

</llo_original>
